<compile_context>
chip_gen: v7x
topology: tpu7x:2x2x1
jax: 0.10.0
libtpu: 0.0.40
codegen_flags: <defaults>
</compile_context>

<pallas_src>
import functools

import jax
import jax.numpy as jnp
from jax.experimental import pallas as pl
from jax.experimental.pallas import tpu as pltpu

OUT_LANES = 128  # lane-dense packed output: lane 0 = logp, lane 1 = v, lane 2 = entropy


def _round_up(x, m):
    return (x + m - 1) // m * m


# ----------------------------------------------------------------------------- #
# Fused Pallas kernel: actor MLP + Categorical stats + hypernetwork critic
# ----------------------------------------------------------------------------- #
def hyperc_fused_kernel(state_ref, meta_ref, action_ref,
                        aw1_ref, ab1_ref, aw2_ref, ab2_ref, aw3_ref, ab3_ref,
                        hw1_ref, hb1_ref, hws_ref, hbs_ref,
                        out_ref):
    f32 = jnp.float32
    cdt = aw1_ref.dtype                      # MXU operand dtype (f32 or bf16), set by pack_params

    x = state_ref[...]                       # (TB, S) f32
    mv = meta_ref[...]                       # (TB, M) f32
    xd = x.astype(cdt)
    mvd = mv.astype(cdt)

    # ------------------------- actor MLP + Categorical ------------------------- #
    h1 = jnp.maximum(
        jnp.dot(xd, aw1_ref[...], preferred_element_type=f32) + ab1_ref[...], 0.0)
    h2 = jnp.maximum(
        jnp.dot(h1.astype(cdt), aw2_ref[...], preferred_element_type=f32) + ab2_ref[...], 0.0)
    logits = jnp.dot(h2.astype(cdt), aw3_ref[...], preferred_element_type=f32) + ab3_ref[...]

    # numerically-stable log-softmax (all f32 VPU/EUP math)
    m = jnp.max(logits, axis=-1, keepdims=True)
    zc = logits - m
    lse = jnp.log(jnp.sum(jnp.exp(zc), axis=-1, keepdims=True))
    logp = zc - lse                                                   # (TB, A)
    probs = jnp.exp(logp)

    TB, A = logits.shape
    a_idx = action_ref[...]                                           # (TB, 1) int32
    onehot = (jax.lax.broadcasted_iota(jnp.int32, (TB, A), 1) == a_idx).astype(f32)
    act_logp = jnp.sum(logp * onehot, axis=-1, keepdims=True)         # (TB, 1)
    ent = -jnp.sum(probs * logp, axis=-1, keepdims=True)              # (TB, 1)

    # --------------------------- hypernetwork critic --------------------------- #
    S = x.shape[1]
    HP = hw1_ref.shape[1] // S                                        # padded hidden width (mult of 128)

    # one wide matmul per head group (merged heads), f32 accumulation
    gw1 = jnp.dot(mvd, hw1_ref[...], preferred_element_type=f32) + hb1_ref[...]   # (TB, S*HP)
    gsm = jnp.dot(mvd, hws_ref[...], preferred_element_type=f32) + hbs_ref[...]   # (TB, 2*HP+128)
    gb1 = gsm[:, 0:HP]                                                # generated b1  (TB, HP)
    gw2 = gsm[:, HP:2 * HP]                                           # generated W2  (TB, HP)
    gb2 = gsm[:, 2 * HP:2 * HP + 1]                                   # generated b2  (TB, 1)

    # per-sample x @ W1[b]: lane-aligned HP-wide slices, tree-summed for ILP
    parts = [x[:, s:s + 1] * gw1[:, s * HP:(s + 1) * HP] for s in range(S)]
    while len(parts) > 1:
        nxt = [parts[i] + parts[i + 1] for i in range(0, len(parts) - 1, 2)]
        if len(parts) % 2:
            nxt.append(parts[-1])
        parts = nxt
    h_crit = jnp.maximum(parts[0] + gb1, 0.0)                         # (TB, HP), padded lanes stay 0
    v = jnp.sum(h_crit * gw2, axis=-1, keepdims=True) + gb2           # (TB, 1)

    # --------------------------- lane-dense packed output ---------------------- #
    lane = jax.lax.broadcasted_iota(jnp.int32, out_ref.shape, 1)      # (TB, 128)
    out_ref[...] = (jnp.where(lane == 0, act_logp, 0.0)
                    + jnp.where(lane == 1, v, 0.0)
                    + jnp.where(lane == 2, ent, 0.0))


# ----------------------------------------------------------------------------- #
# Parameter packing (done once): merge + lane-pad hypernet heads, choose MXU dtype
# ----------------------------------------------------------------------------- #
def pack_params(params, dot_dtype=jnp.float32):
    H = params["actor_b1"].shape[1]
    M, SH = params["hyp_ww1"].shape
    S = SH // H
    HP = _round_up(max(H, 1), 128)

    # W1 head: (M, S*H) -> (M, S, H) -> pad H->HP -> (M, S*HP)  (lane-aligned per-s blocks)
    ww1 = jnp.pad(params["hyp_ww1"].reshape(M, S, H),
                  ((0, 0), (0, 0), (0, HP - H))).reshape(M, S * HP)
    bw1 = jnp.pad(params["hyp_bw1"].reshape(1, S, H),
                  ((0, 0), (0, 0), (0, HP - H))).reshape(1, S * HP)

    # merged "small" heads: [ b1-head (HP) | W2-head (HP) | b2-head (128) ]
    wsm = jnp.concatenate([
        jnp.pad(params["hyp_wb1"], ((0, 0), (0, HP - H))),
        jnp.pad(params["hyp_ww2"], ((0, 0), (0, HP - H))),
        jnp.pad(params["hyp_wb2"], ((0, 0), (0, 127))),
    ], axis=1)
    bsm = jnp.concatenate([
        jnp.pad(params["hyp_bb1"], ((0, 0), (0, HP - H))),
        jnp.pad(params["hyp_bw2"], ((0, 0), (0, HP - H))),
        jnp.pad(params["hyp_bb2"], ((0, 0), (0, 127))),
    ], axis=1)

    # MXU operands (weights) in dot_dtype; biases stay f32 (added after f32 accumulation)
    return {
        "aw1": params["actor_w1"].astype(dot_dtype), "ab1": params["actor_b1"],
        "aw2": params["actor_w2"].astype(dot_dtype), "ab2": params["actor_b2"],
        "aw3": params["actor_w3"].astype(dot_dtype), "ab3": params["actor_b3"],
        "hw1": ww1.astype(dot_dtype), "hb1": bw1,
        "hws": wsm.astype(dot_dtype), "hbs": bsm,
    }


# ----------------------------------------------------------------------------- #
# Wrapper
# ----------------------------------------------------------------------------- #
@functools.partial(jax.jit, static_argnames=("block_b",))
def hyperc_evaluate(packed, meta_v, state, action, block_b=128):
    B, S = state.shape
    M = meta_v.shape[1]
    H = packed["ab1"].shape[1]
    A = packed["ab3"].shape[1]
    HP = (packed["hws"].shape[1] - 128) // 2

    TB = _round_up(min(block_b, B), 8)
    Bp = _round_up(B, TB)
    pad = Bp - B

    state_p = jnp.pad(state, ((0, pad), (0, 0)))
    meta_p = jnp.pad(meta_v, ((0, pad), (0, 0)))
    action_p = jnp.pad(action.astype(jnp.int32).reshape(B, 1), ((0, pad), (0, 0)))

    weights = (packed["aw1"], packed["ab1"], packed["aw2"], packed["ab2"],
               packed["aw3"], packed["ab3"], packed["hw1"], packed["hb1"],
               packed["hws"], packed["hbs"])

    def batch_tile(a):    # batch-tiled inputs (double-buffered by the pipeline)
        return pl.BlockSpec((TB, a.shape[1]), lambda i: (i, 0))

    def resident(a):      # weights: same block every grid step -> stays in VMEM
        return pl.BlockSpec(a.shape, lambda i: (0, 0))

    in_specs = ([batch_tile(state_p), batch_tile(meta_p), batch_tile(action_p)]
                + [resident(w) for w in weights])
    out_spec = pl.BlockSpec((TB, OUT_LANES), lambda i: (i, 0))

    flops = (2 * Bp * (S * H + H * H + H * A)                 # actor
             + 2 * Bp * M * (S * HP + 2 * HP + 128)           # hypernet heads
             + 2 * Bp * S * HP + 2 * Bp * HP)                 # per-sample target net
    bytes_accessed = (sum(int(a.size) * a.dtype.itemsize
                          for a in (state_p, meta_p, action_p) + weights)
                      + Bp * OUT_LANES * 4)
    cost = pl.CostEstimate(flops=flops, transcendentals=2 * Bp * A + Bp,
                           bytes_accessed=bytes_accessed)

    out = pl.pallas_call(
        hyperc_fused_kernel,
        grid=(Bp // TB,),
        in_specs=in_specs,
        out_specs=out_spec,
        out_shape=jax.ShapeDtypeStruct((Bp, OUT_LANES), jnp.float32),
        compiler_params=pltpu.CompilerParams(
            dimension_semantics=("parallel",),
            vmem_limit_bytes=32 * 1024 * 1024),
        cost_estimate=cost,
    )(state_p, meta_p, action_p, *weights)

    logp = out[:B, 0]
    state_values = out[:B, 1:2]
    entropy = out[:B, 2]
    return logp, state_values, entropy


# ----------------------------------------------------------------------------- #
# Deterministic parameter init (kaiming-uniform-style bounds)
# ----------------------------------------------------------------------------- #
def init_params(key, meta_v_dim, state_dim, action_dim, hidden_dim):
    def lin(k, fan_in, fan_out):
        kw, kb = jax.random.split(k)
        wb = jnp.sqrt(6.0 / fan_in)
        bb = 1.0 / jnp.sqrt(fan_in)
        w = jax.random.uniform(kw, (fan_in, fan_out), jnp.float32, -wb, wb)
        b = jax.random.uniform(kb, (1, fan_out), jnp.float32, -bb, bb)
        return w, b

    ks = jax.random.split(key, 7)
    p = {}
    p["actor_w1"], p["actor_b1"] = lin(ks[0], state_dim, hidden_dim)
    p["actor_w2"], p["actor_b2"] = lin(ks[1], hidden_dim, hidden_dim)
    p["actor_w3"], p["actor_b3"] = lin(ks[2], hidden_dim, action_dim)
    # hypernetwork heads (meta_v -> flattened target-net params), output_dim = 1
    p["hyp_ww1"], p["hyp_bw1"] = lin(ks[3], meta_v_dim, state_dim * hidden_dim)
    p["hyp_wb1"], p["hyp_bb1"] = lin(ks[4], meta_v_dim, hidden_dim)
    p["hyp_ww2"], p["hyp_bw2"] = lin(ks[5], meta_v_dim, hidden_dim * 1)
    p["hyp_wb2"], p["hyp_bb2"] = lin(ks[6], meta_v_dim, 1)
    return p


# ----------------------------------------------------------------------------- #
# Plain-JAX reference (correctness sanity check)
# ----------------------------------------------------------------------------- #
def reference_evaluate(p, meta_v, state, action):
    h1 = jax.nn.relu(state @ p["actor_w1"] + p["actor_b1"])
    h2 = jax.nn.relu(h1 @ p["actor_w2"] + p["actor_b2"])
    logits = h2 @ p["actor_w3"] + p["actor_b3"]
    logp = jax.nn.log_softmax(logits, axis=-1)
    a_logp = jnp.take_along_axis(logp, action[:, None].astype(jnp.int32), axis=-1)[:, 0]
    ent = -jnp.sum(jnp.exp(logp) * logp, axis=-1)

    B, S = state.shape
    H = p["actor_b1"].shape[1]
    gw1 = (meta_v @ p["hyp_ww1"] + p["hyp_bw1"]).reshape(B, S, H)
    gb1 = meta_v @ p["hyp_wb1"] + p["hyp_bb1"]
    gw2 = (meta_v @ p["hyp_ww2"] + p["hyp_bw2"]).reshape(B, H, 1)
    gb2 = meta_v @ p["hyp_wb2"] + p["hyp_bb2"]
    h = jax.nn.relu(jnp.einsum("bs,bsh->bh", state, gw1) + gb1)
    v = jnp.einsum("bh,bho->bo", h, gw2) + gb2
    return a_logp, v, ent


# ----------------------------------------------------------------------------- #
if __name__ == "__main__":
    META_V_DIM, STATE_DIM, ACTION_DIM, HIDDEN_DIM = 8, 16, 6, 32
    BATCH = 48          # not a multiple of the tile -> exercises the padding path

    key = jax.random.PRNGKey(0)
    kp, km, ks, ka = jax.random.split(key, 4)

    params = init_params(kp, META_V_DIM, STATE_DIM, ACTION_DIM, HIDDEN_DIM)
    meta_v = jax.random.normal(km, (BATCH, META_V_DIM), jnp.float32)
    state = jax.random.normal(ks, (BATCH, STATE_DIM), jnp.float32)
    action = jax.random.randint(ka, (BATCH,), 0, ACTION_DIM, jnp.int32)

    r_logp, r_values, r_entropy = reference_evaluate(params, meta_v, state, action)

    # --- f32 MXU operands: tight check ---------------------------------------
    packed_f32 = pack_params(params, dot_dtype=jnp.float32)
    logp, values, entropy = hyperc_evaluate(packed_f32, meta_v, state, action, block_b=32)
    jax.block_until_ready((logp, values, entropy))
    assert logp.shape == (BATCH,) and values.shape == (BATCH, 1) and entropy.shape == (BATCH,)
    assert jnp.allclose(logp, r_logp, rtol=1e-4, atol=1e-4)
    assert jnp.allclose(values, r_values, rtol=1e-4, atol=1e-4)
    assert jnp.allclose(entropy, r_entropy, rtol=1e-4, atol=1e-4)

    # --- bf16 MXU operands (v6e/v7x fast path), f32 accumulation: loose check --
    packed_bf16 = pack_params(params, dot_dtype=jnp.bfloat16)
    logp_b, values_b, entropy_b = hyperc_evaluate(packed_bf16, meta_v, state, action, block_b=32)
    jax.block_until_ready((logp_b, values_b, entropy_b))
    assert jnp.allclose(logp_b, r_logp, rtol=1e-1, atol=1e-1)
    assert jnp.allclose(values_b, r_values, rtol=1e-1, atol=1e-1)
    assert jnp.allclose(entropy_b, r_entropy, rtol=1e-1, atol=1e-1)

    print("KERNEL_OK")
</pallas_src>

<mosaic_0001>
module attributes {stable_mosaic.version = 11 : i64} {
  func.func @hyperc_fused_kernel(%arg0: i32, %arg1: memref<32x16xf32, #tpu.memory_space<vmem>>, %arg2: memref<32x8xf32, #tpu.memory_space<vmem>>, %arg3: memref<32x1xi32, #tpu.memory_space<vmem>>, %arg4: memref<16x32xf32, #tpu.memory_space<vmem>>, %arg5: memref<1x32xf32, #tpu.memory_space<vmem>>, %arg6: memref<32x32xf32, #tpu.memory_space<vmem>>, %arg7: memref<1x32xf32, #tpu.memory_space<vmem>>, %arg8: memref<32x6xf32, #tpu.memory_space<vmem>>, %arg9: memref<1x6xf32, #tpu.memory_space<vmem>>, %arg10: memref<8x2048xf32, #tpu.memory_space<vmem>>, %arg11: memref<1x2048xf32, #tpu.memory_space<vmem>>, %arg12: memref<8x384xf32, #tpu.memory_space<vmem>>, %arg13: memref<1x384xf32, #tpu.memory_space<vmem>>, %arg14: memref<32x128xf32, #tpu.memory_space<vmem>>) attributes {dimension_semantics = [#tpu.dimension_semantics<parallel>], iteration_bounds = array<i64: 2>, scalar_prefetch = 0 : i64, scratch_operands = 0 : i64, tpu.core_type = #tpu.core_type<tc>, window_params = [{transform_indices = @transform_0, window_bounds = array<i64: 32, 16>}, {transform_indices = @transform_1, window_bounds = array<i64: 32, 8>}, {transform_indices = @transform_2, window_bounds = array<i64: 32, 1>}, {pipeline_mode = #tpu.pipeline_mode<synchronous>, transform_indices = @transform_3, window_bounds = array<i64: 16, 32>}, {pipeline_mode = #tpu.pipeline_mode<synchronous>, transform_indices = @transform_4, window_bounds = array<i64: 1, 32>}, {pipeline_mode = #tpu.pipeline_mode<synchronous>, transform_indices = @transform_5, window_bounds = array<i64: 32, 32>}, {pipeline_mode = #tpu.pipeline_mode<synchronous>, transform_indices = @transform_6, window_bounds = array<i64: 1, 32>}, {pipeline_mode = #tpu.pipeline_mode<synchronous>, transform_indices = @transform_7, window_bounds = array<i64: 32, 6>}, {pipeline_mode = #tpu.pipeline_mode<synchronous>, transform_indices = @transform_8, window_bounds = array<i64: 1, 6>}, {pipeline_mode = #tpu.pipeline_mode<synchronous>, transform_indices = @transform_9, window_bounds = array<i64: 8, 2048>}, {pipeline_mode = #tpu.pipeline_mode<synchronous>, transform_indices = @transform_10, window_bounds = array<i64: 1, 2048>}, {pipeline_mode = #tpu.pipeline_mode<synchronous>, transform_indices = @transform_11, window_bounds = array<i64: 8, 384>}, {pipeline_mode = #tpu.pipeline_mode<synchronous>, transform_indices = @transform_12, window_bounds = array<i64: 1, 384>}, {transform_indices = @transform_13, window_bounds = array<i64: 32, 128>}]} {
    %c0 = arith.constant 0 : index
    %c0_0 = arith.constant 0 : index
    %0 = vector.load %arg1[%c0, %c0_0] : memref<32x16xf32, #tpu.memory_space<vmem>>, vector<32x16xf32>
    %c0_1 = arith.constant 0 : index
    %c0_2 = arith.constant 0 : index
    %1 = vector.load %arg2[%c0_1, %c0_2] : memref<32x8xf32, #tpu.memory_space<vmem>>, vector<32x8xf32>
    %c0_3 = arith.constant 0 : index
    %c0_4 = arith.constant 0 : index
    %2 = vector.load %arg4[%c0_3, %c0_4] : memref<16x32xf32, #tpu.memory_space<vmem>>, vector<16x32xf32>
    %cst = arith.constant dense<0.000000e+00> : vector<32x32xf32>
    %3 = tpu.matmul %0, %2, %cst {dimension_numbers = #tpu.dot_dimension_numbers<[1], [0], [0], [1], [0, 0, 1, 1], [], []>} : vector<32x16xf32>, vector<16x32xf32>, vector<32x32xf32> -> vector<32x32xf32>
    %c0_5 = arith.constant 0 : index
    %c0_6 = arith.constant 0 : index
    %4 = vector.load %arg5[%c0_5, %c0_6] : memref<1x32xf32, #tpu.memory_space<vmem>>, vector<1x32xf32>
    %5 = vector.broadcast %4 : vector<1x32xf32> to vector<32x32xf32>
    %6 = arith.addf %3, %5 : vector<32x32xf32>
    %cst_7 = arith.constant 0.000000e+00 : f32
    %7 = vector.broadcast %cst_7 : f32 to vector<32x32xf32>
    %8 = arith.maximumf %6, %7 : vector<32x32xf32>
    %c0_8 = arith.constant 0 : index
    %c0_9 = arith.constant 0 : index
    %9 = vector.load %arg6[%c0_8, %c0_9] : memref<32x32xf32, #tpu.memory_space<vmem>>, vector<32x32xf32>
    %cst_10 = arith.constant dense<0.000000e+00> : vector<32x32xf32>
    %10 = tpu.matmul %8, %9, %cst_10 {dimension_numbers = #tpu.dot_dimension_numbers<[1], [0], [0], [1], [0, 0, 1, 1], [], []>} : vector<32x32xf32>, vector<32x32xf32>, vector<32x32xf32> -> vector<32x32xf32>
    %c0_11 = arith.constant 0 : index
    %c0_12 = arith.constant 0 : index
    %11 = vector.load %arg7[%c0_11, %c0_12] : memref<1x32xf32, #tpu.memory_space<vmem>>, vector<1x32xf32>
    %12 = vector.broadcast %11 : vector<1x32xf32> to vector<32x32xf32>
    %13 = arith.addf %10, %12 : vector<32x32xf32>
    %cst_13 = arith.constant 0.000000e+00 : f32
    %14 = vector.broadcast %cst_13 : f32 to vector<32x32xf32>
    %15 = arith.maximumf %13, %14 : vector<32x32xf32>
    %c0_14 = arith.constant 0 : index
    %c0_15 = arith.constant 0 : index
    %16 = vector.load %arg8[%c0_14, %c0_15] : memref<32x6xf32, #tpu.memory_space<vmem>>, vector<32x6xf32>
    %cst_16 = arith.constant dense<0.000000e+00> : vector<32x6xf32>
    %17 = tpu.matmul %15, %16, %cst_16 {dimension_numbers = #tpu.dot_dimension_numbers<[1], [0], [0], [1], [0, 0, 1, 1], [], []>} : vector<32x32xf32>, vector<32x6xf32>, vector<32x6xf32> -> vector<32x6xf32>
    %c0_17 = arith.constant 0 : index
    %c0_18 = arith.constant 0 : index
    %18 = vector.load %arg9[%c0_17, %c0_18] : memref<1x6xf32, #tpu.memory_space<vmem>>, vector<1x6xf32>
    %19 = vector.broadcast %18 : vector<1x6xf32> to vector<32x6xf32>
    %20 = arith.addf %17, %19 : vector<32x6xf32>
    %cst_19 = arith.constant dense<0xFF800000> : vector<32xf32>
    %21 = vector.multi_reduction <maximumf>, %20, %cst_19 [1] : vector<32x6xf32> to vector<32xf32>
    %22 = vector.shape_cast %21 : vector<32xf32> to vector<32x1xf32>
    %23 = vector.broadcast %22 : vector<32x1xf32> to vector<32x6xf32>
    %24 = arith.subf %20, %23 : vector<32x6xf32>
    %25 = math.exp %24 : vector<32x6xf32>
    %cst_20 = arith.constant dense<0.000000e+00> : vector<32xf32>
    %26 = vector.multi_reduction <add>, %25, %cst_20 [1] : vector<32x6xf32> to vector<32xf32>
    %27 = vector.shape_cast %26 : vector<32xf32> to vector<32x1xf32>
    %28 = math.log %27 : vector<32x1xf32>
    %29 = vector.broadcast %28 : vector<32x1xf32> to vector<32x6xf32>
    %30 = arith.subf %24, %29 : vector<32x6xf32>
    %31 = math.exp %30 : vector<32x6xf32>
    %c0_21 = arith.constant 0 : index
    %c0_22 = arith.constant 0 : index
    %32 = vector.load %arg3[%c0_21, %c0_22] : memref<32x1xi32, #tpu.memory_space<vmem>>, vector<32x1xi32>
    %33 = tpu.iota {dimensions = array<i32: 1>} : vector<32x6xi32>
    %34 = vector.broadcast %32 : vector<32x1xi32> to vector<32x6xi32>
    %35 = arith.cmpi eq, %33, %34 : vector<32x6xi32>
    %36 = arith.extui %35 : vector<32x6xi1> to vector<32x6xi32>
    %37 = arith.sitofp %36 : vector<32x6xi32> to vector<32x6xf32>
    %38 = arith.mulf %30, %37 : vector<32x6xf32>
    %cst_23 = arith.constant dense<0.000000e+00> : vector<32xf32>
    %39 = vector.multi_reduction <add>, %38, %cst_23 [1] : vector<32x6xf32> to vector<32xf32>
    %40 = vector.shape_cast %39 : vector<32xf32> to vector<32x1xf32>
    %41 = arith.mulf %31, %30 : vector<32x6xf32>
    %cst_24 = arith.constant dense<0.000000e+00> : vector<32xf32>
    %42 = vector.multi_reduction <add>, %41, %cst_24 [1] : vector<32x6xf32> to vector<32xf32>
    %43 = vector.shape_cast %42 : vector<32xf32> to vector<32x1xf32>
    %cst_25 = arith.constant 0.000000e+00 : f32
    %44 = vector.broadcast %cst_25 : f32 to vector<32x1xf32>
    %45 = arith.subf %44, %43 : vector<32x1xf32>
    %c0_26 = arith.constant 0 : index
    %c0_27 = arith.constant 0 : index
    %46 = vector.load %arg10[%c0_26, %c0_27] : memref<8x2048xf32, #tpu.memory_space<vmem>>, vector<8x2048xf32>
    %cst_28 = arith.constant dense<0.000000e+00> : vector<32x2048xf32>
    %47 = tpu.matmul %1, %46, %cst_28 {dimension_numbers = #tpu.dot_dimension_numbers<[1], [0], [0], [1], [0, 0, 1, 1], [], []>} : vector<32x8xf32>, vector<8x2048xf32>, vector<32x2048xf32> -> vector<32x2048xf32>
    %c0_29 = arith.constant 0 : index
    %c0_30 = arith.constant 0 : index
    %48 = vector.load %arg11[%c0_29, %c0_30] : memref<1x2048xf32, #tpu.memory_space<vmem>>, vector<1x2048xf32>
    %49 = vector.broadcast %48 : vector<1x2048xf32> to vector<32x2048xf32>
    %50 = arith.addf %47, %49 : vector<32x2048xf32>
    %c0_31 = arith.constant 0 : index
    %c0_32 = arith.constant 0 : index
    %51 = vector.load %arg12[%c0_31, %c0_32] : memref<8x384xf32, #tpu.memory_space<vmem>>, vector<8x384xf32>
    %cst_33 = arith.constant dense<0.000000e+00> : vector<32x384xf32>
    %52 = tpu.matmul %1, %51, %cst_33 {dimension_numbers = #tpu.dot_dimension_numbers<[1], [0], [0], [1], [0, 0, 1, 1], [], []>} : vector<32x8xf32>, vector<8x384xf32>, vector<32x384xf32> -> vector<32x384xf32>
    %c0_34 = arith.constant 0 : index
    %c0_35 = arith.constant 0 : index
    %53 = vector.load %arg13[%c0_34, %c0_35] : memref<1x384xf32, #tpu.memory_space<vmem>>, vector<1x384xf32>
    %54 = vector.broadcast %53 : vector<1x384xf32> to vector<32x384xf32>
    %55 = arith.addf %52, %54 : vector<32x384xf32>
    %56 = vector.extract_strided_slice %55 {offsets = [0, 0], sizes = [32, 128], strides = [1, 1]} : vector<32x384xf32> to vector<32x128xf32>
    %57 = vector.extract_strided_slice %55 {offsets = [0, 128], sizes = [32, 128], strides = [1, 1]} : vector<32x384xf32> to vector<32x128xf32>
    %58 = vector.extract_strided_slice %55 {offsets = [0, 256], sizes = [32, 1], strides = [1, 1]} : vector<32x384xf32> to vector<32x1xf32>
    %59 = vector.extract_strided_slice %0 {offsets = [0, 0], sizes = [32, 1], strides = [1, 1]} : vector<32x16xf32> to vector<32x1xf32>
    %60 = vector.extract_strided_slice %50 {offsets = [0, 0], sizes = [32, 128], strides = [1, 1]} : vector<32x2048xf32> to vector<32x128xf32>
    %61 = vector.broadcast %59 : vector<32x1xf32> to vector<32x128xf32>
    %62 = arith.mulf %61, %60 : vector<32x128xf32>
    %63 = vector.extract_strided_slice %0 {offsets = [0, 1], sizes = [32, 1], strides = [1, 1]} : vector<32x16xf32> to vector<32x1xf32>
    %64 = vector.extract_strided_slice %50 {offsets = [0, 128], sizes = [32, 128], strides = [1, 1]} : vector<32x2048xf32> to vector<32x128xf32>
    %65 = vector.broadcast %63 : vector<32x1xf32> to vector<32x128xf32>
    %66 = arith.mulf %65, %64 : vector<32x128xf32>
    %67 = vector.extract_strided_slice %0 {offsets = [0, 2], sizes = [32, 1], strides = [1, 1]} : vector<32x16xf32> to vector<32x1xf32>
    %68 = vector.extract_strided_slice %50 {offsets = [0, 256], sizes = [32, 128], strides = [1, 1]} : vector<32x2048xf32> to vector<32x128xf32>
    %69 = vector.broadcast %67 : vector<32x1xf32> to vector<32x128xf32>
    %70 = arith.mulf %69, %68 : vector<32x128xf32>
    %71 = vector.extract_strided_slice %0 {offsets = [0, 3], sizes = [32, 1], strides = [1, 1]} : vector<32x16xf32> to vector<32x1xf32>
    %72 = vector.extract_strided_slice %50 {offsets = [0, 384], sizes = [32, 128], strides = [1, 1]} : vector<32x2048xf32> to vector<32x128xf32>
    %73 = vector.broadcast %71 : vector<32x1xf32> to vector<32x128xf32>
    %74 = arith.mulf %73, %72 : vector<32x128xf32>
    %75 = vector.extract_strided_slice %0 {offsets = [0, 4], sizes = [32, 1], strides = [1, 1]} : vector<32x16xf32> to vector<32x1xf32>
    %76 = vector.extract_strided_slice %50 {offsets = [0, 512], sizes = [32, 128], strides = [1, 1]} : vector<32x2048xf32> to vector<32x128xf32>
    %77 = vector.broadcast %75 : vector<32x1xf32> to vector<32x128xf32>
    %78 = arith.mulf %77, %76 : vector<32x128xf32>
    %79 = vector.extract_strided_slice %0 {offsets = [0, 5], sizes = [32, 1], strides = [1, 1]} : vector<32x16xf32> to vector<32x1xf32>
    %80 = vector.extract_strided_slice %50 {offsets = [0, 640], sizes = [32, 128], strides = [1, 1]} : vector<32x2048xf32> to vector<32x128xf32>
    %81 = vector.broadcast %79 : vector<32x1xf32> to vector<32x128xf32>
    %82 = arith.mulf %81, %80 : vector<32x128xf32>
    %83 = vector.extract_strided_slice %0 {offsets = [0, 6], sizes = [32, 1], strides = [1, 1]} : vector<32x16xf32> to vector<32x1xf32>
    %84 = vector.extract_strided_slice %50 {offsets = [0, 768], sizes = [32, 128], strides = [1, 1]} : vector<32x2048xf32> to vector<32x128xf32>
    %85 = vector.broadcast %83 : vector<32x1xf32> to vector<32x128xf32>
    %86 = arith.mulf %85, %84 : vector<32x128xf32>
    %87 = vector.extract_strided_slice %0 {offsets = [0, 7], sizes = [32, 1], strides = [1, 1]} : vector<32x16xf32> to vector<32x1xf32>
    %88 = vector.extract_strided_slice %50 {offsets = [0, 896], sizes = [32, 128], strides = [1, 1]} : vector<32x2048xf32> to vector<32x128xf32>
    %89 = vector.broadcast %87 : vector<32x1xf32> to vector<32x128xf32>
    %90 = arith.mulf %89, %88 : vector<32x128xf32>
    %91 = vector.extract_strided_slice %0 {offsets = [0, 8], sizes = [32, 1], strides = [1, 1]} : vector<32x16xf32> to vector<32x1xf32>
    %92 = vector.extract_strided_slice %50 {offsets = [0, 1024], sizes = [32, 128], strides = [1, 1]} : vector<32x2048xf32> to vector<32x128xf32>
    %93 = vector.broadcast %91 : vector<32x1xf32> to vector<32x128xf32>
    %94 = arith.mulf %93, %92 : vector<32x128xf32>
    %95 = vector.extract_strided_slice %0 {offsets = [0, 9], sizes = [32, 1], strides = [1, 1]} : vector<32x16xf32> to vector<32x1xf32>
    %96 = vector.extract_strided_slice %50 {offsets = [0, 1152], sizes = [32, 128], strides = [1, 1]} : vector<32x2048xf32> to vector<32x128xf32>
    %97 = vector.broadcast %95 : vector<32x1xf32> to vector<32x128xf32>
    %98 = arith.mulf %97, %96 : vector<32x128xf32>
    %99 = vector.extract_strided_slice %0 {offsets = [0, 10], sizes = [32, 1], strides = [1, 1]} : vector<32x16xf32> to vector<32x1xf32>
    %100 = vector.extract_strided_slice %50 {offsets = [0, 1280], sizes = [32, 128], strides = [1, 1]} : vector<32x2048xf32> to vector<32x128xf32>
    %101 = vector.broadcast %99 : vector<32x1xf32> to vector<32x128xf32>
    %102 = arith.mulf %101, %100 : vector<32x128xf32>
    %103 = vector.extract_strided_slice %0 {offsets = [0, 11], sizes = [32, 1], strides = [1, 1]} : vector<32x16xf32> to vector<32x1xf32>
    %104 = vector.extract_strided_slice %50 {offsets = [0, 1408], sizes = [32, 128], strides = [1, 1]} : vector<32x2048xf32> to vector<32x128xf32>
    %105 = vector.broadcast %103 : vector<32x1xf32> to vector<32x128xf32>
    %106 = arith.mulf %105, %104 : vector<32x128xf32>
    %107 = vector.extract_strided_slice %0 {offsets = [0, 12], sizes = [32, 1], strides = [1, 1]} : vector<32x16xf32> to vector<32x1xf32>
    %108 = vector.extract_strided_slice %50 {offsets = [0, 1536], sizes = [32, 128], strides = [1, 1]} : vector<32x2048xf32> to vector<32x128xf32>
    %109 = vector.broadcast %107 : vector<32x1xf32> to vector<32x128xf32>
    %110 = arith.mulf %109, %108 : vector<32x128xf32>
    %111 = vector.extract_strided_slice %0 {offsets = [0, 13], sizes = [32, 1], strides = [1, 1]} : vector<32x16xf32> to vector<32x1xf32>
    %112 = vector.extract_strided_slice %50 {offsets = [0, 1664], sizes = [32, 128], strides = [1, 1]} : vector<32x2048xf32> to vector<32x128xf32>
    %113 = vector.broadcast %111 : vector<32x1xf32> to vector<32x128xf32>
    %114 = arith.mulf %113, %112 : vector<32x128xf32>
    %115 = vector.extract_strided_slice %0 {offsets = [0, 14], sizes = [32, 1], strides = [1, 1]} : vector<32x16xf32> to vector<32x1xf32>
    %116 = vector.extract_strided_slice %50 {offsets = [0, 1792], sizes = [32, 128], strides = [1, 1]} : vector<32x2048xf32> to vector<32x128xf32>
    %117 = vector.broadcast %115 : vector<32x1xf32> to vector<32x128xf32>
    %118 = arith.mulf %117, %116 : vector<32x128xf32>
    %119 = vector.extract_strided_slice %0 {offsets = [0, 15], sizes = [32, 1], strides = [1, 1]} : vector<32x16xf32> to vector<32x1xf32>
    %120 = vector.extract_strided_slice %50 {offsets = [0, 1920], sizes = [32, 128], strides = [1, 1]} : vector<32x2048xf32> to vector<32x128xf32>
    %121 = vector.broadcast %119 : vector<32x1xf32> to vector<32x128xf32>
    %122 = arith.mulf %121, %120 : vector<32x128xf32>
    %123 = arith.addf %62, %66 : vector<32x128xf32>
    %124 = arith.addf %70, %74 : vector<32x128xf32>
    %125 = arith.addf %78, %82 : vector<32x128xf32>
    %126 = arith.addf %86, %90 : vector<32x128xf32>
    %127 = arith.addf %94, %98 : vector<32x128xf32>
    %128 = arith.addf %102, %106 : vector<32x128xf32>
    %129 = arith.addf %110, %114 : vector<32x128xf32>
    %130 = arith.addf %118, %122 : vector<32x128xf32>
    %131 = arith.addf %123, %124 : vector<32x128xf32>
    %132 = arith.addf %125, %126 : vector<32x128xf32>
    %133 = arith.addf %127, %128 : vector<32x128xf32>
    %134 = arith.addf %129, %130 : vector<32x128xf32>
    %135 = arith.addf %131, %132 : vector<32x128xf32>
    %136 = arith.addf %133, %134 : vector<32x128xf32>
    %137 = arith.addf %135, %136 : vector<32x128xf32>
    %138 = arith.addf %137, %56 : vector<32x128xf32>
    %cst_36 = arith.constant 0.000000e+00 : f32
    %139 = vector.broadcast %cst_36 : f32 to vector<32x128xf32>
    %140 = arith.maximumf %138, %139 : vector<32x128xf32>
    %141 = arith.mulf %140, %57 : vector<32x128xf32>
    %cst_37 = arith.constant dense<0.000000e+00> : vector<32xf32>
    %142 = vector.multi_reduction <add>, %141, %cst_37 [1] : vector<32x128xf32> to vector<32xf32>
    %143 = vector.shape_cast %142 : vector<32xf32> to vector<32x1xf32>
    %144 = arith.addf %143, %58 : vector<32x1xf32>
    %145 = tpu.iota {dimensions = array<i32: 1>} : vector<32x128xi32>
    %c0_i32 = arith.constant 0 : i32
    %146 = vector.broadcast %c0_i32 : i32 to vector<32x128xi32>
    %147 = arith.cmpi eq, %145, %146 : vector<32x128xi32>
    %cst_38 = arith.constant 0.000000e+00 : f32
    %148 = vector.shape_cast %40 : vector<32x1xf32> to vector<32x1xf32>
    %149 = vector.broadcast %148 : vector<32x1xf32> to vector<32x128xf32>
    %150 = vector.broadcast %cst_38 : f32 to vector<32x128xf32>
    %151 = arith.select %147, %149, %150 : vector<32x128xi1>, vector<32x128xf32>
    %c1_i32 = arith.constant 1 : i32
    %152 = vector.broadcast %c1_i32 : i32 to vector<32x128xi32>
    %153 = arith.cmpi eq, %145, %152 : vector<32x128xi32>
    %cst_39 = arith.constant 0.000000e+00 : f32
    %154 = vector.shape_cast %144 : vector<32x1xf32> to vector<32x1xf32>
    %155 = vector.broadcast %154 : vector<32x1xf32> to vector<32x128xf32>
    %156 = vector.broadcast %cst_39 : f32 to vector<32x128xf32>
    %157 = arith.select %153, %155, %156 : vector<32x128xi1>, vector<32x128xf32>
    %158 = arith.addf %151, %157 : vector<32x128xf32>
    %c2_i32 = arith.constant 2 : i32
    %159 = vector.broadcast %c2_i32 : i32 to vector<32x128xi32>
    %160 = arith.cmpi eq, %145, %159 : vector<32x128xi32>
    %cst_40 = arith.constant 0.000000e+00 : f32
    %161 = vector.shape_cast %45 : vector<32x1xf32> to vector<32x1xf32>
    %162 = vector.broadcast %161 : vector<32x1xf32> to vector<32x128xf32>
    %163 = vector.broadcast %cst_40 : f32 to vector<32x128xf32>
    %164 = arith.select %160, %162, %163 : vector<32x128xi1>, vector<32x128xf32>
    %165 = arith.addf %158, %164 : vector<32x128xf32>
    %c0_41 = arith.constant 0 : index
    %c0_42 = arith.constant 0 : index
    %166 = vector.load %arg14[%c0_41, %c0_42] : memref<32x128xf32, #tpu.memory_space<vmem>>, vector<32x128xf32>
    tpu.vector_store %arg14[%c0_41, %c0_42], %165 {strides = array<i32>} : memref<32x128xf32, #tpu.memory_space<vmem>>, vector<32x128xf32>,
    return
  }
  func.func @transform_0(%arg0: i32) -> (i32, i32) {
    %c0_i32 = arith.constant 0 : i32
    %c0_i32_0 = arith.constant 0 : i32
    return %arg0, %c0_i32 : i32, i32
  }
  func.func @transform_1(%arg0: i32) -> (i32, i32) {
    %c0_i32 = arith.constant 0 : i32
    %c0_i32_0 = arith.constant 0 : i32
    return %arg0, %c0_i32 : i32, i32
  }
  func.func @transform_2(%arg0: i32) -> (i32, i32) {
    %c0_i32 = arith.constant 0 : i32
    %c0_i32_0 = arith.constant 0 : i32
    return %arg0, %c0_i32 : i32, i32
  }
  func.func @transform_3(%arg0: i32) -> (i32, i32) {
    %c0_i32 = arith.constant 0 : i32
    %c0_i32_0 = arith.constant 0 : i32
    %c0_i32_1 = arith.constant 0 : i32
    return %c0_i32, %c0_i32_0 : i32, i32
  }
  func.func @transform_4(%arg0: i32) -> (i32, i32) {
    %c0_i32 = arith.constant 0 : i32
    %c0_i32_0 = arith.constant 0 : i32
    %c0_i32_1 = arith.constant 0 : i32
    return %c0_i32, %c0_i32_0 : i32, i32
  }
  func.func @transform_5(%arg0: i32) -> (i32, i32) {
    %c0_i32 = arith.constant 0 : i32
    %c0_i32_0 = arith.constant 0 : i32
    %c0_i32_1 = arith.constant 0 : i32
    return %c0_i32, %c0_i32_0 : i32, i32
  }
  func.func @transform_6(%arg0: i32) -> (i32, i32) {
    %c0_i32 = arith.constant 0 : i32
    %c0_i32_0 = arith.constant 0 : i32
    %c0_i32_1 = arith.constant 0 : i32
    return %c0_i32, %c0_i32_0 : i32, i32
  }
  func.func @transform_7(%arg0: i32) -> (i32, i32) {
    %c0_i32 = arith.constant 0 : i32
    %c0_i32_0 = arith.constant 0 : i32
    %c0_i32_1 = arith.constant 0 : i32
    return %c0_i32, %c0_i32_0 : i32, i32
  }
  func.func @transform_8(%arg0: i32) -> (i32, i32) {
    %c0_i32 = arith.constant 0 : i32
    %c0_i32_0 = arith.constant 0 : i32
    %c0_i32_1 = arith.constant 0 : i32
    return %c0_i32, %c0_i32_0 : i32, i32
  }
  func.func @transform_9(%arg0: i32) -> (i32, i32) {
    %c0_i32 = arith.constant 0 : i32
    %c0_i32_0 = arith.constant 0 : i32
    %c0_i32_1 = arith.constant 0 : i32
    return %c0_i32, %c0_i32_0 : i32, i32
  }
  func.func @transform_10(%arg0: i32) -> (i32, i32) {
    %c0_i32 = arith.constant 0 : i32
    %c0_i32_0 = arith.constant 0 : i32
    %c0_i32_1 = arith.constant 0 : i32
    return %c0_i32, %c0_i32_0 : i32, i32
  }
  func.func @transform_11(%arg0: i32) -> (i32, i32) {
    %c0_i32 = arith.constant 0 : i32
    %c0_i32_0 = arith.constant 0 : i32
    %c0_i32_1 = arith.constant 0 : i32
    return %c0_i32, %c0_i32_0 : i32, i32
  }
  func.func @transform_12(%arg0: i32) -> (i32, i32) {
    %c0_i32 = arith.constant 0 : i32
    %c0_i32_0 = arith.constant 0 : i32
    %c0_i32_1 = arith.constant 0 : i32
    return %c0_i32, %c0_i32_0 : i32, i32
  }
  func.func @transform_13(%arg0: i32) -> (i32, i32) {
    %c0_i32 = arith.constant 0 : i32
    %c0_i32_0 = arith.constant 0 : i32
    return %arg0, %c0_i32 : i32, i32
  }
}

</mosaic_0001>

<llo_original>
// kernel: hyperc_evaluate.1
$region0: #{hyperc_evaluate.1}
  #allocation0 [shape = 'u32[]', space=smem, size = 0x4, offset = 0x4, fixed_abs, tag = 'smem constant byte address 0x4 - core index']
  #allocation1 [shape = 'u32[144,128]{1,0:T(1,128)}', space=vmem, size = 0x12000, scoped, tag = 'internal scratch']
  %s0 = inlined_call_operand.vmem [shape: f32[64,16], index: 0, kind: input, shape index: {}]
  %s1 = inlined_call_operand.vmem [shape: f32[64,8], index: 1, kind: input, shape index: {}]
  %s2 = inlined_call_operand.vmem [shape: s32[64,1], index: 2, kind: input, shape index: {}]
  %s3 = inlined_call_operand.vmem [shape: f32[16,32], index: 3, kind: input, shape index: {}]
  %s4 = inlined_call_operand.vmem [shape: f32[1,32], index: 4, kind: input, shape index: {}]
  %s5 = inlined_call_operand.vmem [shape: f32[32,32], index: 5, kind: input, shape index: {}]
  %s6 = inlined_call_operand.vmem [shape: f32[1,32], index: 6, kind: input, shape index: {}]
  %s7 = inlined_call_operand.vmem [shape: f32[32,6], index: 7, kind: input, shape index: {}]
  %s8 = inlined_call_operand.vmem [shape: f32[1,6], index: 8, kind: input, shape index: {}]
  %s9 = inlined_call_operand.vmem [shape: f32[8,2048], index: 9, kind: input, shape index: {}]
  %s10 = inlined_call_operand.vmem [shape: f32[1,2048], index: 10, kind: input, shape index: {}]
  %s11 = inlined_call_operand.vmem [shape: f32[8,384], index: 11, kind: input, shape index: {}]
  %s12 = inlined_call_operand.vmem [shape: f32[1,384], index: 12, kind: input, shape index: {}]
  %s13 = inlined_call_operand.vmem [shape: f32[64,128], index: 13, kind: output, shape index: {}]
  %s14 = sld [smem:[#allocation0]]
  $region85: #{hyperc_evaluate.1} parent=0
    _
  %s16 = ssub.s32 1, %s14
  %s17 = scalar_select 0, %s16, %s14
  loop: start=0, step=1, limit=4
  $region2: #{hyperc_evaluate.1} parent=0 // loop_pre_header
    _
  $region3: #{hyperc_evaluate.1} parent=0 // loop_header
    %s19 = sphi 0, %s23
    %p20 = scmp.ge.s32.totalorder %s19, 4
    %s29 = sphi 0, %s31
    %s32 = sphi 0, %s29
    %s33 = sphi 0, %s32
    %s49 = sphi 0, %s33
    %s55 = sphi 0, %s57
    %s58 = sphi 0, %s55
    %s59 = sphi 0, %s58
    %s75 = sphi 0, %s59
    %s81 = sphi 0, %s83
    %s84 = sphi 0, %s81
    %s85 = sphi 0, %s84
    %s101 = sphi 0, %s85
    %s105 = sphi 0, %s105
    %s107 = sphi 0, %s105
    %s108 = sphi 0, %s107
    %s122 = sphi 0, %s108
    %s126 = sphi 0, %s126
    %s128 = sphi 0, %s126
    %s129 = sphi 0, %s128
    %s143 = sphi 0, %s129
    %s147 = sphi 0, %s147
    %s149 = sphi 0, %s147
    %s150 = sphi 0, %s149
    %s164 = sphi 0, %s150
    %s168 = sphi 0, %s168
    %s170 = sphi 0, %s168
    %s171 = sphi 0, %s170
    %s185 = sphi 0, %s171
    %s189 = sphi 0, %s189
    %s191 = sphi 0, %s189
    %s192 = sphi 0, %s191
    %s206 = sphi 0, %s192
    %s210 = sphi 0, %s210
    %s212 = sphi 0, %s210
    %s213 = sphi 0, %s212
    %s227 = sphi 0, %s213
    %s231 = sphi 0, %s231
    %s233 = sphi 0, %s231
    %s234 = sphi 0, %s233
    %s248 = sphi 0, %s234
    %s252 = sphi 0, %s252
    %s254 = sphi 0, %s252
    %s255 = sphi 0, %s254
    %s269 = sphi 0, %s255
    %s273 = sphi 0, %s273
    %s275 = sphi 0, %s273
    %s276 = sphi 0, %s275
    %s290 = sphi 0, %s276
    %s294 = sphi 0, %s294
    %s296 = sphi 0, %s294
    %s297 = sphi 0, %s296
    %s311 = sphi 0, %s297
    %s317 = sphi 0, %s319
    %s320 = sphi 0, %s317
    %s321 = sphi 0, %s320
    %s337 = sphi 0, %s321
  $region4: #{hyperc_evaluate.1} parent=0 // loop_header_branch
    %22 = sbr.rel (%p20) target = $region8
  $region5: #{hyperc_evaluate.1} parent=0 // loop_body
    %s24 = ssub.s32 %s19, 1
    %s25 = ssub.s32 %s19, 2
    %s26 = sadd.s32 %s19, 1
    %s27 = ssub.s32 %s19, %s26
    %p28 = scmp.eq.s32.totalorder %s27, 0
    %s30 = sadd.s32 %s29, 1
    %s31 = scalar_select %p28, %s29, %s30
    %p34 = pneg %p28
    %p35 = scmp.eq.s32.totalorder %s19, 1
    %p36 = por %p34, %p35
    %p37 = scmp.ne.s32.totalorder %s29, %s32
    %p38 = scmp.eq.s32.totalorder %s19, 0
    %p39 = por %p37, %p38
    %p40 = scmp.ne.s32.totalorder %s29, %s32
    %p41 = scmp.eq.s32.totalorder %s24, 1
    %p42 = por %p40, %p41
    %p43 = scmp.ne.s32.totalorder %s32, %s33
    %p44 = scmp.eq.s32.totalorder %s24, 0
    %p45 = por %p43, %p44
    %p46 = scmp.ne.s32.totalorder %s32, %s33
    %p47 = scmp.eq.s32.totalorder %s25, 1
    %p48 = por %p46, %p47
    %p50 = scmp.ne.s32.totalorder %s33, %s49
    %p51 = scmp.eq.s32.totalorder %s25, 0
    %p52 = por %p50, %p51
    %s53 = ssub.s32 %s19, %s26
    %p54 = scmp.eq.s32.totalorder %s53, 0
    %s56 = sadd.s32 %s55, 1
    %s57 = scalar_select %p54, %s55, %s56
    %p60 = pneg %p54
    %p61 = scmp.eq.s32.totalorder %s19, 1
    %p62 = por %p60, %p61
    %p63 = scmp.ne.s32.totalorder %s55, %s58
    %p64 = scmp.eq.s32.totalorder %s19, 0
    %p65 = por %p63, %p64
    %p66 = scmp.ne.s32.totalorder %s55, %s58
    %p67 = scmp.eq.s32.totalorder %s24, 1
    %p68 = por %p66, %p67
    %p69 = scmp.ne.s32.totalorder %s58, %s59
    %p70 = scmp.eq.s32.totalorder %s24, 0
    %p71 = por %p69, %p70
    %p72 = scmp.ne.s32.totalorder %s58, %s59
    %p73 = scmp.eq.s32.totalorder %s25, 1
    %p74 = por %p72, %p73
    %p76 = scmp.ne.s32.totalorder %s59, %s75
    %p77 = scmp.eq.s32.totalorder %s25, 0
    %p78 = por %p76, %p77
    %s79 = ssub.s32 %s19, %s26
    %p80 = scmp.eq.s32.totalorder %s79, 0
    %s82 = sadd.s32 %s81, 1
    %s83 = scalar_select %p80, %s81, %s82
    %p86 = pneg %p80
    %p87 = scmp.eq.s32.totalorder %s19, 1
    %p88 = por %p86, %p87
    %p89 = scmp.ne.s32.totalorder %s81, %s84
    %p90 = scmp.eq.s32.totalorder %s19, 0
    %p91 = por %p89, %p90
    %p92 = scmp.ne.s32.totalorder %s81, %s84
    %p93 = scmp.eq.s32.totalorder %s24, 1
    %p94 = por %p92, %p93
    %p95 = scmp.ne.s32.totalorder %s84, %s85
    %p96 = scmp.eq.s32.totalorder %s24, 0
    %p97 = por %p95, %p96
    %p98 = scmp.ne.s32.totalorder %s84, %s85
    %p99 = scmp.eq.s32.totalorder %s25, 1
    %p100 = por %p98, %p99
    %p102 = scmp.ne.s32.totalorder %s85, %s101
    %p103 = scmp.eq.s32.totalorder %s25, 0
    %p104 = por %p102, %p103
    %s106 = sadd.s32 %s105, 1
    %p109 = scmp.eq.s32.totalorder %s19, 1
    %p110 = scmp.ne.s32.totalorder %s105, %s107
    %p111 = scmp.eq.s32.totalorder %s19, 0
    %p112 = por %p110, %p111
    %p113 = scmp.ne.s32.totalorder %s105, %s107
    %p114 = scmp.eq.s32.totalorder %s24, 1
    %p115 = por %p113, %p114
    %p116 = scmp.ne.s32.totalorder %s107, %s108
    %p117 = scmp.eq.s32.totalorder %s24, 0
    %p118 = por %p116, %p117
    %p119 = scmp.ne.s32.totalorder %s107, %s108
    %p120 = scmp.eq.s32.totalorder %s25, 1
    %p121 = por %p119, %p120
    %p123 = scmp.ne.s32.totalorder %s108, %s122
    %p124 = scmp.eq.s32.totalorder %s25, 0
    %p125 = por %p123, %p124
    %s127 = sadd.s32 %s126, 1
    %p130 = scmp.eq.s32.totalorder %s19, 1
    %p131 = scmp.ne.s32.totalorder %s126, %s128
    %p132 = scmp.eq.s32.totalorder %s19, 0
    %p133 = por %p131, %p132
    %p134 = scmp.ne.s32.totalorder %s126, %s128
    %p135 = scmp.eq.s32.totalorder %s24, 1
    %p136 = por %p134, %p135
    %p137 = scmp.ne.s32.totalorder %s128, %s129
    %p138 = scmp.eq.s32.totalorder %s24, 0
    %p139 = por %p137, %p138
    %p140 = scmp.ne.s32.totalorder %s128, %s129
    %p141 = scmp.eq.s32.totalorder %s25, 1
    %p142 = por %p140, %p141
    %p144 = scmp.ne.s32.totalorder %s129, %s143
    %p145 = scmp.eq.s32.totalorder %s25, 0
    %p146 = por %p144, %p145
    %s148 = sadd.s32 %s147, 1
    %p151 = scmp.eq.s32.totalorder %s19, 1
    %p152 = scmp.ne.s32.totalorder %s147, %s149
    %p153 = scmp.eq.s32.totalorder %s19, 0
    %p154 = por %p152, %p153
    %p155 = scmp.ne.s32.totalorder %s147, %s149
    %p156 = scmp.eq.s32.totalorder %s24, 1
    %p157 = por %p155, %p156
    %p158 = scmp.ne.s32.totalorder %s149, %s150
    %p159 = scmp.eq.s32.totalorder %s24, 0
    %p160 = por %p158, %p159
    %p161 = scmp.ne.s32.totalorder %s149, %s150
    %p162 = scmp.eq.s32.totalorder %s25, 1
    %p163 = por %p161, %p162
    %p165 = scmp.ne.s32.totalorder %s150, %s164
    %p166 = scmp.eq.s32.totalorder %s25, 0
    %p167 = por %p165, %p166
    %s169 = sadd.s32 %s168, 1
    %p172 = scmp.eq.s32.totalorder %s19, 1
    %p173 = scmp.ne.s32.totalorder %s168, %s170
    %p174 = scmp.eq.s32.totalorder %s19, 0
    %p175 = por %p173, %p174
    %p176 = scmp.ne.s32.totalorder %s168, %s170
    %p177 = scmp.eq.s32.totalorder %s24, 1
    %p178 = por %p176, %p177
    %p179 = scmp.ne.s32.totalorder %s170, %s171
    %p180 = scmp.eq.s32.totalorder %s24, 0
    %p181 = por %p179, %p180
    %p182 = scmp.ne.s32.totalorder %s170, %s171
    %p183 = scmp.eq.s32.totalorder %s25, 1
    %p184 = por %p182, %p183
    %p186 = scmp.ne.s32.totalorder %s171, %s185
    %p187 = scmp.eq.s32.totalorder %s25, 0
    %p188 = por %p186, %p187
    %s190 = sadd.s32 %s189, 1
    %p193 = scmp.eq.s32.totalorder %s19, 1
    %p194 = scmp.ne.s32.totalorder %s189, %s191
    %p195 = scmp.eq.s32.totalorder %s19, 0
    %p196 = por %p194, %p195
    %p197 = scmp.ne.s32.totalorder %s189, %s191
    %p198 = scmp.eq.s32.totalorder %s24, 1
    %p199 = por %p197, %p198
    %p200 = scmp.ne.s32.totalorder %s191, %s192
    %p201 = scmp.eq.s32.totalorder %s24, 0
    %p202 = por %p200, %p201
    %p203 = scmp.ne.s32.totalorder %s191, %s192
    %p204 = scmp.eq.s32.totalorder %s25, 1
    %p205 = por %p203, %p204
    %p207 = scmp.ne.s32.totalorder %s192, %s206
    %p208 = scmp.eq.s32.totalorder %s25, 0
    %p209 = por %p207, %p208
    %s211 = sadd.s32 %s210, 1
    %p214 = scmp.eq.s32.totalorder %s19, 1
    %p215 = scmp.ne.s32.totalorder %s210, %s212
    %p216 = scmp.eq.s32.totalorder %s19, 0
    %p217 = por %p215, %p216
    %p218 = scmp.ne.s32.totalorder %s210, %s212
    %p219 = scmp.eq.s32.totalorder %s24, 1
    %p220 = por %p218, %p219
    %p221 = scmp.ne.s32.totalorder %s212, %s213
    %p222 = scmp.eq.s32.totalorder %s24, 0
    %p223 = por %p221, %p222
    %p224 = scmp.ne.s32.totalorder %s212, %s213
    %p225 = scmp.eq.s32.totalorder %s25, 1
    %p226 = por %p224, %p225
    %p228 = scmp.ne.s32.totalorder %s213, %s227
    %p229 = scmp.eq.s32.totalorder %s25, 0
    %p230 = por %p228, %p229
    %s232 = sadd.s32 %s231, 1
    %p235 = scmp.eq.s32.totalorder %s19, 1
    %p236 = scmp.ne.s32.totalorder %s231, %s233
    %p237 = scmp.eq.s32.totalorder %s19, 0
    %p238 = por %p236, %p237
    %p239 = scmp.ne.s32.totalorder %s231, %s233
    %p240 = scmp.eq.s32.totalorder %s24, 1
    %p241 = por %p239, %p240
    %p242 = scmp.ne.s32.totalorder %s233, %s234
    %p243 = scmp.eq.s32.totalorder %s24, 0
    %p244 = por %p242, %p243
    %p245 = scmp.ne.s32.totalorder %s233, %s234
    %p246 = scmp.eq.s32.totalorder %s25, 1
    %p247 = por %p245, %p246
    %p249 = scmp.ne.s32.totalorder %s234, %s248
    %p250 = scmp.eq.s32.totalorder %s25, 0
    %p251 = por %p249, %p250
    %s253 = sadd.s32 %s252, 1
    %p256 = scmp.eq.s32.totalorder %s19, 1
    %p257 = scmp.ne.s32.totalorder %s252, %s254
    %p258 = scmp.eq.s32.totalorder %s19, 0
    %p259 = por %p257, %p258
    %p260 = scmp.ne.s32.totalorder %s252, %s254
    %p261 = scmp.eq.s32.totalorder %s24, 1
    %p262 = por %p260, %p261
    %p263 = scmp.ne.s32.totalorder %s254, %s255
    %p264 = scmp.eq.s32.totalorder %s24, 0
    %p265 = por %p263, %p264
    %p266 = scmp.ne.s32.totalorder %s254, %s255
    %p267 = scmp.eq.s32.totalorder %s25, 1
    %p268 = por %p266, %p267
    %p270 = scmp.ne.s32.totalorder %s255, %s269
    %p271 = scmp.eq.s32.totalorder %s25, 0
    %p272 = por %p270, %p271
    %s274 = sadd.s32 %s273, 1
    %p277 = scmp.eq.s32.totalorder %s19, 1
    %p278 = scmp.ne.s32.totalorder %s273, %s275
    %p279 = scmp.eq.s32.totalorder %s19, 0
    %p280 = por %p278, %p279
    %p281 = scmp.ne.s32.totalorder %s273, %s275
    %p282 = scmp.eq.s32.totalorder %s24, 1
    %p283 = por %p281, %p282
    %p284 = scmp.ne.s32.totalorder %s275, %s276
    %p285 = scmp.eq.s32.totalorder %s24, 0
    %p286 = por %p284, %p285
    %p287 = scmp.ne.s32.totalorder %s275, %s276
    %p288 = scmp.eq.s32.totalorder %s25, 1
    %p289 = por %p287, %p288
    %p291 = scmp.ne.s32.totalorder %s276, %s290
    %p292 = scmp.eq.s32.totalorder %s25, 0
    %p293 = por %p291, %p292
    %s295 = sadd.s32 %s294, 1
    %p298 = scmp.eq.s32.totalorder %s19, 1
    %p299 = scmp.ne.s32.totalorder %s294, %s296
    %p300 = scmp.eq.s32.totalorder %s19, 0
    %p301 = por %p299, %p300
    %p302 = scmp.ne.s32.totalorder %s294, %s296
    %p303 = scmp.eq.s32.totalorder %s24, 1
    %p304 = por %p302, %p303
    %p305 = scmp.ne.s32.totalorder %s296, %s297
    %p306 = scmp.eq.s32.totalorder %s24, 0
    %p307 = por %p305, %p306
    %p308 = scmp.ne.s32.totalorder %s296, %s297
    %p309 = scmp.eq.s32.totalorder %s25, 1
    %p310 = por %p308, %p309
    %p312 = scmp.ne.s32.totalorder %s297, %s311
    %p313 = scmp.eq.s32.totalorder %s25, 0
    %p314 = por %p312, %p313
    %s315 = ssub.s32 %s19, %s26
    %p316 = scmp.eq.s32.totalorder %s315, 0
    %s318 = sadd.s32 %s317, 1
    %s319 = scalar_select %p316, %s317, %s318
    %p322 = pneg %p316
    %p323 = scmp.eq.s32.totalorder %s19, 1
    %p324 = por %p322, %p323
    %p325 = scmp.ne.s32.totalorder %s317, %s320
    %p326 = scmp.eq.s32.totalorder %s19, 0
    %p327 = por %p325, %p326
    %p328 = scmp.ne.s32.totalorder %s317, %s320
    %p329 = scmp.eq.s32.totalorder %s24, 1
    %p330 = por %p328, %p329
    %p331 = scmp.ne.s32.totalorder %s320, %s321
    %p332 = scmp.eq.s32.totalorder %s24, 0
    %p333 = por %p331, %p332
    %p334 = scmp.ne.s32.totalorder %s320, %s321
    %p335 = scmp.eq.s32.totalorder %s25, 1
    %p336 = por %p334, %p335
    %p338 = scmp.ne.s32.totalorder %s321, %s337
    %p339 = scmp.eq.s32.totalorder %s25, 0
    %p340 = por %p338, %p339
    %p341 = scmp.le.s32.totalorder 1, %s19
    %p342 = scmp.lt.s32.totalorder %s19, 3
    %p343 = pnand %p341, %p342
    %p344 = pneg %p343
    // Predicated region
    $region9: #{hyperc_evaluate.1} parent=5 // pred_check
      _
    $region10: #{hyperc_evaluate.1} parent=5 // pred_check_branch
      %346 = sbr.rel (%p343) target = $region12
    $region11: #{hyperc_evaluate.1} parent=5 // pred_region
      %s347 = ssub.s32 %s19, 1
      // Predicated region
      $region13: #{hyperc_evaluate.1} parent=11 // pred_check
        %p348 = pneg %p118
      $region14: #{hyperc_evaluate.1} parent=11 // pred_check_branch
        %350 = sbr.rel (%p348) target = $region16
      $region15: #{hyperc_evaluate.1} parent=11 // pred_region
        _
      $region16: #{hyperc_evaluate.1} parent=11 // pred_fallthru
        _
      // Predicated region
      $region17: #{hyperc_evaluate.1} parent=11 // pred_check
        %p351 = pneg %p139
      $region18: #{hyperc_evaluate.1} parent=11 // pred_check_branch
        %353 = sbr.rel (%p351) target = $region20
      $region19: #{hyperc_evaluate.1} parent=11 // pred_region
        _
      $region20: #{hyperc_evaluate.1} parent=11 // pred_fallthru
        _
      // Predicated region
      $region21: #{hyperc_evaluate.1} parent=11 // pred_check
        %p354 = pneg %p160
      $region22: #{hyperc_evaluate.1} parent=11 // pred_check_branch
        %356 = sbr.rel (%p354) target = $region24
      $region23: #{hyperc_evaluate.1} parent=11 // pred_region
        _
      $region24: #{hyperc_evaluate.1} parent=11 // pred_fallthru
        _
      // Predicated region
      $region25: #{hyperc_evaluate.1} parent=11 // pred_check
        %p357 = pneg %p181
      $region26: #{hyperc_evaluate.1} parent=11 // pred_check_branch
        %359 = sbr.rel (%p357) target = $region28
      $region27: #{hyperc_evaluate.1} parent=11 // pred_region
        _
      $region28: #{hyperc_evaluate.1} parent=11 // pred_fallthru
        _
      // Predicated region
      $region29: #{hyperc_evaluate.1} parent=11 // pred_check
        %p360 = pneg %p202
      $region30: #{hyperc_evaluate.1} parent=11 // pred_check_branch
        %362 = sbr.rel (%p360) target = $region32
      $region31: #{hyperc_evaluate.1} parent=11 // pred_region
        _
      $region32: #{hyperc_evaluate.1} parent=11 // pred_fallthru
        _
      // Predicated region
      $region33: #{hyperc_evaluate.1} parent=11 // pred_check
        %p363 = pneg %p223
      $region34: #{hyperc_evaluate.1} parent=11 // pred_check_branch
        %365 = sbr.rel (%p363) target = $region36
      $region35: #{hyperc_evaluate.1} parent=11 // pred_region
        _
      $region36: #{hyperc_evaluate.1} parent=11 // pred_fallthru
        _
      // Predicated region
      $region37: #{hyperc_evaluate.1} parent=11 // pred_check
        %p366 = pneg %p244
      $region38: #{hyperc_evaluate.1} parent=11 // pred_check_branch
        %368 = sbr.rel (%p366) target = $region40
      $region39: #{hyperc_evaluate.1} parent=11 // pred_region
        _
      $region40: #{hyperc_evaluate.1} parent=11 // pred_fallthru
        _
      // Predicated region
      $region41: #{hyperc_evaluate.1} parent=11 // pred_check
        %p369 = pneg %p265
      $region42: #{hyperc_evaluate.1} parent=11 // pred_check_branch
        %371 = sbr.rel (%p369) target = $region44
      $region43: #{hyperc_evaluate.1} parent=11 // pred_region
        _
      $region44: #{hyperc_evaluate.1} parent=11 // pred_fallthru
        _
      // Predicated region
      $region45: #{hyperc_evaluate.1} parent=11 // pred_check
        %p372 = pneg %p286
      $region46: #{hyperc_evaluate.1} parent=11 // pred_check_branch
        %374 = sbr.rel (%p372) target = $region48
      $region47: #{hyperc_evaluate.1} parent=11 // pred_region
        _
      $region48: #{hyperc_evaluate.1} parent=11 // pred_fallthru
        _
      // Predicated region
      $region49: #{hyperc_evaluate.1} parent=11 // pred_check
        %p375 = pneg %p307
      $region50: #{hyperc_evaluate.1} parent=11 // pred_check_branch
        %377 = sbr.rel (%p375) target = $region52
      $region51: #{hyperc_evaluate.1} parent=11 // pred_region
        _
      $region52: #{hyperc_evaluate.1} parent=11 // pred_fallthru
        _
    $region12: #{hyperc_evaluate.1} parent=5 // pred_fallthru
      _
    %p378 = scmp.lt.s32.totalorder %s19, 2
    // Predicated region
    $region53: #{hyperc_evaluate.1} parent=5 // pred_check
      %p379 = pneg %p378
    $region54: #{hyperc_evaluate.1} parent=5 // pred_check_branch
      %381 = sbr.rel (%p379) target = $region56
    $region55: #{hyperc_evaluate.1} parent=5 // pred_region
      // Predicated region
      $region57: #{hyperc_evaluate.1} parent=55 // pred_check
        %p382 = pneg %p39
      $region58: #{hyperc_evaluate.1} parent=55 // pred_check_branch
        %384 = sbr.rel (%p382) target = $region60
      $region59: #{hyperc_evaluate.1} parent=55 // pred_region
        %s385 = smul.u32 4, %s19
        %p386 = scmp.lt.s32.totalorder %s385, 7
        %s387 = scalar_select %p386, %s385, 7
        %s388 = smul.addr %s387, 8
        %s389 = scalar_lea.vmem %s0, %s388
        %s390 = smul.u32 4, %s19
      $region60: #{hyperc_evaluate.1} parent=55 // pred_fallthru
        _
      // Predicated region
      $region61: #{hyperc_evaluate.1} parent=55 // pred_check
        %p391 = pneg %p65
      $region62: #{hyperc_evaluate.1} parent=55 // pred_check_branch
        %393 = sbr.rel (%p391) target = $region64
      $region63: #{hyperc_evaluate.1} parent=55 // pred_region
        %s394 = smul.u32 4, %s19
        %p395 = scmp.lt.s32.totalorder %s394, 7
        %s396 = scalar_select %p395, %s394, 7
        %s397 = smul.addr %s396, 8
        %s398 = scalar_lea.vmem %s1, %s397
        %s399 = smul.u32 4, %s19
      $region64: #{hyperc_evaluate.1} parent=55 // pred_fallthru
        _
      // Predicated region
      $region65: #{hyperc_evaluate.1} parent=55 // pred_check
        %p400 = pneg %p91
      $region66: #{hyperc_evaluate.1} parent=55 // pred_check_branch
        %402 = sbr.rel (%p400) target = $region68
      $region67: #{hyperc_evaluate.1} parent=55 // pred_region
        %s403 = smul.u32 4, %s19
        %p404 = scmp.lt.s32.totalorder %s403, 7
        %s405 = scalar_select %p404, %s403, 7
        %s406 = smul.addr %s405, 8
        %s407 = scalar_lea.vmem %s2, %s406
        %s408 = smul.u32 4, %s19
      $region68: #{hyperc_evaluate.1} parent=55 // pred_fallthru
        _
    $region56: #{hyperc_evaluate.1} parent=5 // pred_fallthru
      _
    %p409 = scmp.le.s32.totalorder 1, %s19
    %p410 = scmp.lt.s32.totalorder %s19, 3
    %p411 = pnand %p409, %p410
    %p412 = pneg %p411
    // Predicated region
    $region69: #{hyperc_evaluate.1} parent=5 // pred_check
      _
    $region70: #{hyperc_evaluate.1} parent=5 // pred_check_branch
      %414 = sbr.rel (%p411) target = $region72
    $region71: #{hyperc_evaluate.1} parent=5 // pred_region
      %s415 = ssub.s32 %s19, 1
      %s416 = smul.u32 4, %s24
      %p417 = scmp.lt.s32.totalorder %s416, 7
      %s418 = scalar_select %p417, %s416, 7
      %s419 = smul.addr %s418, 8
      %s420 = scalar_lea.vmem %s0, %s419
      %p421 = pneg %p45
      %p422 = pneg %p42
      %s423 = smul.u32 4, %s24
      %p424 = scmp.lt.s32.totalorder %s423, 7
      %s425 = scalar_select %p424, %s423, 7
      %s426 = smul.addr %s425, 8
      %s427 = scalar_lea.vmem %s1, %s426
      %p428 = pneg %p71
      %p429 = pneg %p68
      %s430 = smul.u32 4, %s24
      %p431 = scmp.lt.s32.totalorder %s430, 7
      %s432 = scalar_select %p431, %s430, 7
      %s433 = smul.addr %s432, 8
      %s434 = scalar_lea.vmem %s2, %s433
      %p435 = pneg %p97
      %p436 = pneg %p94
      %p437 = pneg %p118
      %p438 = pneg %p115
      %p439 = pneg %p139
      %p440 = pneg %p136
      %p441 = pneg %p160
      %p442 = pneg %p157
      %p443 = pneg %p181
      %p444 = pneg %p178
      %p445 = pneg %p202
      %p446 = pneg %p199
      %p447 = pneg %p223
      %p448 = pneg %p220
      %p449 = pneg %p244
      %p450 = pneg %p241
      %p451 = pneg %p265
      %p452 = pneg %p262
      %p453 = pneg %p286
      %p454 = pneg %p283
      %p455 = pneg %p307
      %p456 = pneg %p304
      %p457 = pneg %p333
      %p458 = pneg %p330
      %s459 = smul.u32 4, %s24
      %p460 = scmp.lt.s32.totalorder %s459, 7
      %s461 = scalar_select %p460, %s459, 7
      %s462 = smul.addr %s461, 8
      %s463 = scalar_lea.vmem %s13, %s462
      %s464 = smul.u32 4, %s24
      %p465 = scmp.lt.s32.totalorder %s464, 7
      %s466 = scalar_select %p465, %s464, 7
      %s467 = smul.addr %s466, 8
      %s468 = scalar_lea.vmem %s0, %s467
      %s469 = smul.u32 4, %s24
      %s470 = smul.u32 4, %s24
      %p471 = scmp.lt.s32.totalorder %s470, 7
      %s472 = scalar_select %p471, %s470, 7
      %s473 = smul.addr %s472, 8
      %s474 = scalar_lea.vmem %s1, %s473
      %s475 = smul.u32 4, %s24
      %s476 = smul.u32 4, %s24
      %p477 = scmp.lt.s32.totalorder %s476, 7
      %s478 = scalar_select %p477, %s476, 7
      %s479 = smul.addr %s478, 8
      %s480 = scalar_lea.vmem %s2, %s479
      %s481 = smul.u32 4, %s24
      %s482 = smul.u32 4, %s24
      %p483 = scmp.lt.s32.totalorder %s482, 7
      %s484 = scalar_select %p483, %s482, 7
      %s485 = smul.addr %s484, 8
      %s486 = scalar_lea.vmem %s13, %s485
      %s487 = smul.u32 4, %s24
      %v488 = vld [vmem:[%s468] sm:$0xff]
      %v489 = vld [vmem:[%s468 + $0x8] sm:$0xff]
      %v490 = vld [vmem:[%s468 + $0x10] sm:$0xff]
      %v491 = vld [vmem:[%s468 + $0x18] sm:$0xff]
      %v492 = vld [vmem:[%s474] sm:$0xff]
      %v493 = vld [vmem:[%s474 + $0x8] sm:$0xff]
      %v494 = vld [vmem:[%s474 + $0x10] sm:$0xff]
      %v495 = vld [vmem:[%s474 + $0x18] sm:$0xff]
      %v496 = vld [vmem:[%s3] sm:$0xff]
      %v497 = vld [vmem:[%s3 + $0x8] sm:$0xff]
      %v498 = vld [vmem:[%s4] sm:$0x1]
      %v500 = vlaneseq
      %v501 = vshrl.u32 %v500, 7
      %v502 = vsub.s32 0, %v501
      %v503 = vrot.slane %v498, %v502
      %vm505 = vcmask 130048
      %v507 = vsel %vm505, %v488, 0
      %v510 = vsel %vm505, %v489, 0
      %v513 = vsel %vm505, %v490, 0
      %v516 = vsel %vm505, %v491, 0
      %518 = vmatprep.subr.mxu0 0.0
      %519 = vmatpush1.msra.mxu0 %v496
      %520 = vmatprep.subr.mxu0 0.0
      %521 = vmatpush1.msra.mxu0 %v497
      %522 = vmatprep.subr.mxu0 0.0
      %523 = vmatpush1.msra.mxu0 0.0
      %524 = vmatprep.subr.mxu0 0.0
      %525 = vmatpush1.msra.mxu0 0.0
      %526 = vmatprep.subr.mxu0 0.0
      %527 = vmatpush1.msra.mxu0 0.0
      %528 = vmatprep.subr.mxu0 0.0
      %529 = vmatpush1.msra.mxu0 0.0
      %530 = vmatprep.subr.mxu0 0.0
      %531 = vmatpush1.msra.mxu0 0.0
      %532 = vmatprep.subr.mxu0 0.0
      %533 = vmatpush1.msra.mxu0 0.0
      %534 = vmatprep.subr.mxu0 0.0
      %535 = vmatpush1.msra.mxu0 0.0
      %536 = vmatprep.subr.mxu0 0.0
      %537 = vmatpush1.msra.mxu0 0.0
      %538 = vmatprep.subr.mxu0 0.0
      %539 = vmatpush1.msra.mxu0 0.0
      %540 = vmatprep.subr.mxu0 0.0
      %541 = vmatpush1.msra.mxu0 0.0
      %542 = vmatprep.subr.mxu0 0.0
      %543 = vmatpush1.msra.mxu0 0.0
      %544 = vmatprep.subr.mxu0 0.0
      %545 = vmatpush1.msra.mxu0 0.0
      %546 = vmatprep.subr.mxu0 0.0
      %547 = vmatpush1.msra.mxu0 0.0
      %548 = vmatprep.subr.mxu0 0.0
      %549 = vmatpush1.msra.mxu0 0.0
      %550 = vmatprep.subr.mxu0 0.0
      %551 = vmatpush1.msra.mxu0 0.0
      %552 = vmatprep.subr.mxu0 0.0
      %553 = vmatpush1.msra.mxu0 0.0
      %554 = vmatprep.subr.mxu0 0.0
      %555 = vmatpush1.msra.mxu0 0.0
      %556 = vmatprep.subr.mxu0 0.0
      %557 = vmatpush1.msra.mxu0 0.0
      %558 = vmatprep.subr.mxu0 0.0
      %559 = vmatpush1.msra.mxu0 0.0
      %560 = vmatprep.subr.mxu0 0.0
      %561 = vmatpush1.msra.mxu0 0.0
      %562 = vmatprep.subr.mxu0 0.0
      %563 = vmatpush1.msra.mxu0 0.0
      %564 = vmatprep.subr.mxu0 0.0
      %565 = vmatpush1.msra.mxu0 0.0
      %566 = vmatprep.subr.mxu0 0.0
      %567 = vmatpush1.msra.mxu0 0.0
      %568 = vmatprep.subr.mxu0 0.0
      %569 = vmatpush1.msra.mxu0 0.0
      %570 = vmatprep.subr.mxu0 0.0
      %571 = vmatpush1.msra.mxu0 0.0
      %572 = vmatprep.subr.mxu0 0.0
      %573 = vmatpush1.msra.mxu0 0.0
      %574 = vmatprep.subr.mxu0 0.0
      %575 = vmatpush1.msra.mxu0 0.0
      %576 = vmatprep.subr.mxu0 0.0
      %577 = vmatpush1.msra.mxu0 0.0
      %578 = vmatprep.subr.mxu0 0.0
      %579 = vmatpush1.msra.mxu0 0.0
      %580 = vmatprep.subr.mxu0 0.0
      %581 = vmatpush1.msra.mxu0 0.0
      %582 = vmatprep.mubr.f32.mxu0 0.0
      %583 = vmatmul.mubr.f32.gmra.mrb[0].mxu0 %v507
      %v584 = vpop.f32.mrb[0].mxu0
      %v585 = vadd.f32 %v503, %v584
      %v586 = vpop.f32.mrb[0].mxu0
      %587 = vmatprep.mubr.f32.mxu0 0.0
      %588 = vmatmul.mubr.f32.gmra.mrb[0].mxu0 %v510
      %v589 = vpop.f32.mrb[0].mxu0
      %v590 = vadd.f32 %v503, %v589
      %v591 = vpop.f32.mrb[0].mxu0
      %592 = vmatprep.mubr.f32.mxu0 0.0
      %593 = vmatmul.mubr.f32.gmra.mrb[0].mxu0 %v513
      %v594 = vpop.f32.mrb[0].mxu0
      %v595 = vadd.f32 %v503, %v594
      %v596 = vpop.f32.mrb[0].mxu0
      %597 = vmatprep.mubr.f32.mxu0 0.0
      %598 = vmatmul.mubr.f32.gmra.mrb[0].mxu0 %v516
      %v599 = vpop.f32.mrb[0].mxu0
      %v600 = vadd.f32 %v503, %v599
      %v601 = vpop.f32.mrb[0].mxu0
      %602 = vdwg.mxu0
      %v603 = vmax.f32 %v585, 0.0
      %v604 = vmax.f32 %v590, 0.0
      %v605 = vmax.f32 %v595, 0.0
      %v606 = vmax.f32 %v600, 0.0
      %v607 = vld [vmem:[%s5] sm:$0xff]
      %v608 = vld [vmem:[%s5 + $0x8] sm:$0xff]
      %v609 = vld [vmem:[%s5 + $0x10] sm:$0xff]
      %v610 = vld [vmem:[%s5 + $0x18] sm:$0xff]
      %v611 = vld [vmem:[%s6] sm:$0x1]
      %v613 = vlaneseq
      %v614 = vshrl.u32 %v613, 7
      %v615 = vsub.s32 0, %v614
      %v616 = vrot.slane %v611, %v615
      %vm618 = vcmask 261120
      %v620 = vsel %vm618, %v603, 0
      %v623 = vsel %vm618, %v604, 0
      %v626 = vsel %vm618, %v605, 0
      %v629 = vsel %vm618, %v606, 0
      %631 = vmatprep.subr.mxu0 0.0
      %632 = vmatpush1.msra.mxu0 %v607
      %633 = vmatprep.subr.mxu0 0.0
      %634 = vmatpush1.msra.mxu0 %v608
      %635 = vmatprep.subr.mxu0 0.0
      %636 = vmatpush1.msra.mxu0 %v609
      %637 = vmatprep.subr.mxu0 0.0
      %638 = vmatpush1.msra.mxu0 %v610
      %639 = vmatprep.subr.mxu0 0.0
      %640 = vmatpush1.msra.mxu0 0.0
      %641 = vmatprep.subr.mxu0 0.0
      %642 = vmatpush1.msra.mxu0 0.0
      %643 = vmatprep.subr.mxu0 0.0
      %644 = vmatpush1.msra.mxu0 0.0
      %645 = vmatprep.subr.mxu0 0.0
      %646 = vmatpush1.msra.mxu0 0.0
      %647 = vmatprep.subr.mxu0 0.0
      %648 = vmatpush1.msra.mxu0 0.0
      %649 = vmatprep.subr.mxu0 0.0
      %650 = vmatpush1.msra.mxu0 0.0
      %651 = vmatprep.subr.mxu0 0.0
      %652 = vmatpush1.msra.mxu0 0.0
      %653 = vmatprep.subr.mxu0 0.0
      %654 = vmatpush1.msra.mxu0 0.0
      %655 = vmatprep.subr.mxu0 0.0
      %656 = vmatpush1.msra.mxu0 0.0
      %657 = vmatprep.subr.mxu0 0.0
      %658 = vmatpush1.msra.mxu0 0.0
      %659 = vmatprep.subr.mxu0 0.0
      %660 = vmatpush1.msra.mxu0 0.0
      %661 = vmatprep.subr.mxu0 0.0
      %662 = vmatpush1.msra.mxu0 0.0
      %663 = vmatprep.subr.mxu0 0.0
      %664 = vmatpush1.msra.mxu0 0.0
      %665 = vmatprep.subr.mxu0 0.0
      %666 = vmatpush1.msra.mxu0 0.0
      %667 = vmatprep.subr.mxu0 0.0
      %668 = vmatpush1.msra.mxu0 0.0
      %669 = vmatprep.subr.mxu0 0.0
      %670 = vmatpush1.msra.mxu0 0.0
      %671 = vmatprep.subr.mxu0 0.0
      %672 = vmatpush1.msra.mxu0 0.0
      %673 = vmatprep.subr.mxu0 0.0
      %674 = vmatpush1.msra.mxu0 0.0
      %675 = vmatprep.subr.mxu0 0.0
      %676 = vmatpush1.msra.mxu0 0.0
      %677 = vmatprep.subr.mxu0 0.0
      %678 = vmatpush1.msra.mxu0 0.0
      %679 = vmatprep.subr.mxu0 0.0
      %680 = vmatpush1.msra.mxu0 0.0
      %681 = vmatprep.subr.mxu0 0.0
      %682 = vmatpush1.msra.mxu0 0.0
      %683 = vmatprep.subr.mxu0 0.0
      %684 = vmatpush1.msra.mxu0 0.0
      %685 = vmatprep.subr.mxu0 0.0
      %686 = vmatpush1.msra.mxu0 0.0
      %687 = vmatprep.subr.mxu0 0.0
      %688 = vmatpush1.msra.mxu0 0.0
      %689 = vmatprep.subr.mxu0 0.0
      %690 = vmatpush1.msra.mxu0 0.0
      %691 = vmatprep.subr.mxu0 0.0
      %692 = vmatpush1.msra.mxu0 0.0
      %693 = vmatprep.subr.mxu0 0.0
      %694 = vmatpush1.msra.mxu0 0.0
      %695 = vmatprep.mubr.f32.mxu0 0.0
      %696 = vmatmul.mubr.f32.gmra.mrb[0].mxu0 %v620
      %v697 = vpop.f32.mrb[0].mxu0
      %v698 = vadd.f32 %v616, %v697
      %v699 = vpop.f32.mrb[0].mxu0
      %700 = vmatprep.mubr.f32.mxu0 0.0
      %701 = vmatmul.mubr.f32.gmra.mrb[0].mxu0 %v623
      %v702 = vpop.f32.mrb[0].mxu0
      %v703 = vadd.f32 %v616, %v702
      %v704 = vpop.f32.mrb[0].mxu0
      %705 = vmatprep.mubr.f32.mxu0 0.0
      %706 = vmatmul.mubr.f32.gmra.mrb[0].mxu0 %v626
      %v707 = vpop.f32.mrb[0].mxu0
      %v708 = vadd.f32 %v616, %v707
      %v709 = vpop.f32.mrb[0].mxu0
      %710 = vmatprep.mubr.f32.mxu0 0.0
      %711 = vmatmul.mubr.f32.gmra.mrb[0].mxu0 %v629
      %v712 = vpop.f32.mrb[0].mxu0
      %v713 = vadd.f32 %v616, %v712
      %v714 = vpop.f32.mrb[0].mxu0
      %715 = vdwg.mxu0
      %v716 = vmax.f32 %v698, 0.0
      %v717 = vmax.f32 %v703, 0.0
      %v718 = vmax.f32 %v708, 0.0
      %v719 = vmax.f32 %v713, 0.0
      %v720 = vld [vmem:[%s7] sm:$0xff]
      %v721 = vld [vmem:[%s7 + $0x8] sm:$0xff]
      %v722 = vld [vmem:[%s7 + $0x10] sm:$0xff]
      %v723 = vld [vmem:[%s7 + $0x18] sm:$0xff]
      %v724 = vld [vmem:[%s8] sm:$0x1]
      %v726 = vlaneseq
      %v727 = vshrl.u32 %v726, 7
      %v728 = vsub.s32 0, %v727
      %v729 = vrot.slane %v724, %v728
      %v732 = vsel %vm618, %v716, 0
      %v735 = vsel %vm618, %v717, 0
      %v738 = vsel %vm618, %v718, 0
      %v741 = vsel %vm618, %v719, 0
      %743 = vmatprep.subr.mxu0 0.0
      %744 = vmatpush1.msra.mxu0 %v720
      %745 = vmatprep.subr.mxu0 0.0
      %746 = vmatpush1.msra.mxu0 %v721
      %747 = vmatprep.subr.mxu0 0.0
      %748 = vmatpush1.msra.mxu0 %v722
      %749 = vmatprep.subr.mxu0 0.0
      %750 = vmatpush1.msra.mxu0 %v723
      %751 = vmatprep.subr.mxu0 0.0
      %752 = vmatpush1.msra.mxu0 0.0
      %753 = vmatprep.subr.mxu0 0.0
      %754 = vmatpush1.msra.mxu0 0.0
      %755 = vmatprep.subr.mxu0 0.0
      %756 = vmatpush1.msra.mxu0 0.0
      %757 = vmatprep.subr.mxu0 0.0
      %758 = vmatpush1.msra.mxu0 0.0
      %759 = vmatprep.subr.mxu0 0.0
      %760 = vmatpush1.msra.mxu0 0.0
      %761 = vmatprep.subr.mxu0 0.0
      %762 = vmatpush1.msra.mxu0 0.0
      %763 = vmatprep.subr.mxu0 0.0
      %764 = vmatpush1.msra.mxu0 0.0
      %765 = vmatprep.subr.mxu0 0.0
      %766 = vmatpush1.msra.mxu0 0.0
      %767 = vmatprep.subr.mxu0 0.0
      %768 = vmatpush1.msra.mxu0 0.0
      %769 = vmatprep.subr.mxu0 0.0
      %770 = vmatpush1.msra.mxu0 0.0
      %771 = vmatprep.subr.mxu0 0.0
      %772 = vmatpush1.msra.mxu0 0.0
      %773 = vmatprep.subr.mxu0 0.0
      %774 = vmatpush1.msra.mxu0 0.0
      %775 = vmatprep.subr.mxu0 0.0
      %776 = vmatpush1.msra.mxu0 0.0
      %777 = vmatprep.subr.mxu0 0.0
      %778 = vmatpush1.msra.mxu0 0.0
      %779 = vmatprep.subr.mxu0 0.0
      %780 = vmatpush1.msra.mxu0 0.0
      %781 = vmatprep.subr.mxu0 0.0
      %782 = vmatpush1.msra.mxu0 0.0
      %783 = vmatprep.subr.mxu0 0.0
      %784 = vmatpush1.msra.mxu0 0.0
      %785 = vmatprep.subr.mxu0 0.0
      %786 = vmatpush1.msra.mxu0 0.0
      %787 = vmatprep.subr.mxu0 0.0
      %788 = vmatpush1.msra.mxu0 0.0
      %789 = vmatprep.subr.mxu0 0.0
      %790 = vmatpush1.msra.mxu0 0.0
      %791 = vmatprep.subr.mxu0 0.0
      %792 = vmatpush1.msra.mxu0 0.0
      %793 = vmatprep.subr.mxu0 0.0
      %794 = vmatpush1.msra.mxu0 0.0
      %795 = vmatprep.subr.mxu0 0.0
      %796 = vmatpush1.msra.mxu0 0.0
      %797 = vmatprep.subr.mxu0 0.0
      %798 = vmatpush1.msra.mxu0 0.0
      %799 = vmatprep.subr.mxu0 0.0
      %800 = vmatpush1.msra.mxu0 0.0
      %801 = vmatprep.subr.mxu0 0.0
      %802 = vmatpush1.msra.mxu0 0.0
      %803 = vmatprep.subr.mxu0 0.0
      %804 = vmatpush1.msra.mxu0 0.0
      %805 = vmatprep.subr.mxu0 0.0
      %806 = vmatpush1.msra.mxu0 0.0
      %807 = vmatprep.mubr.f32.mxu0 0.0
      %808 = vmatmul.mubr.f32.gmra.mrb[0].mxu0 %v732
      %v809 = vpop.f32.mrb[0].mxu0
      %v810 = vadd.f32 %v729, %v809
      %v811 = vpop.f32.mrb[0].mxu0
      %812 = vmatprep.mubr.f32.mxu0 0.0
      %813 = vmatmul.mubr.f32.gmra.mrb[0].mxu0 %v735
      %v814 = vpop.f32.mrb[0].mxu0
      %v815 = vadd.f32 %v729, %v814
      %v816 = vpop.f32.mrb[0].mxu0
      %817 = vmatprep.mubr.f32.mxu0 0.0
      %818 = vmatmul.mubr.f32.gmra.mrb[0].mxu0 %v738
      %v819 = vpop.f32.mrb[0].mxu0
      %v820 = vadd.f32 %v729, %v819
      %v821 = vpop.f32.mrb[0].mxu0
      %822 = vmatprep.mubr.f32.mxu0 0.0
      %823 = vmatmul.mubr.f32.gmra.mrb[0].mxu0 %v741
      %v824 = vpop.f32.mrb[0].mxu0
      %v825 = vadd.f32 %v729, %v824
      %v826 = vpop.f32.mrb[0].mxu0
      %827 = vdwg.mxu0
      %vm828 = vcmask 48128
      %v829 = vsel %vm828, %v810, -inf
      %830 = vmax.xlane.f32.xlu0 %v829
      %v831 = vpop.xlane.xlu0 %830
      %v832 = vsel %vm828, %v815, -inf
      %833 = vmax.xlane.f32.xlu0 %v832
      %v834 = vpop.xlane.xlu0 %833
      %v835 = vsel %vm828, %v820, -inf
      %836 = vmax.xlane.f32.xlu0 %v835
      %v837 = vpop.xlane.xlu0 %836
      %v838 = vsel %vm828, %v825, -inf
      %839 = vmax.xlane.f32.xlu0 %v838
      %v840 = vpop.xlane.xlu0 %839
      %v841 = vsub.f32 %v810, %v831
      %v842 = vsub.f32 %v815, %v834
      %v843 = vsub.f32 %v820, %v837
      %v844 = vsub.f32 %v825, %v840
      %v845 = vmul.f32 %v841, 1.442695
      %v846 = vpow.pop %v845
      %v847 = vmul.f32 %v842, 1.442695
      %v848 = vpow.pop %v847
      %v849 = vmul.f32 %v843, 1.442695
      %v850 = vpow.pop %v849
      %v851 = vmul.f32 %v844, 1.442695
      %v852 = vpow.pop %v851
      %v853 = vsel %vm828, %v846, 0.0
      %854 = vadd.xlane.f32.xlu0 %v853
      %v855 = vpop.xlane.xlu0 %854
      %v856 = vsel %vm828, %v848, 0.0
      %857 = vadd.xlane.f32.xlu0 %v856
      %v858 = vpop.xlane.xlu0 %857
      %v859 = vsel %vm828, %v850, 0.0
      %860 = vadd.xlane.f32.xlu0 %v859
      %v861 = vpop.xlane.xlu0 %860
      %v862 = vsel %vm828, %v852, 0.0
      %863 = vadd.xlane.f32.xlu0 %v862
      %v864 = vpop.xlane.xlu0 %863
      %v865 = vlog2.pop %v855
      %v866 = vmul.f32 %v865, 0.6931472
      %v867 = vlog2.pop %v858
      %v868 = vmul.f32 %v867, 0.6931472
      %v869 = vlog2.pop %v861
      %v870 = vmul.f32 %v869, 0.6931472
      %v871 = vlog2.pop %v864
      %v872 = vmul.f32 %v871, 0.6931472
      %v873 = vsub.f32 %v841, %v866
      %v874 = vsub.f32 %v842, %v868
      %v875 = vsub.f32 %v843, %v870
      %v876 = vsub.f32 %v844, %v872
      %v877 = vmul.f32 %v873, 1.442695
      %v878 = vpow.pop %v877
      %v879 = vmul.f32 %v874, 1.442695
      %v880 = vpow.pop %v879
      %v881 = vmul.f32 %v875, 1.442695
      %v882 = vpow.pop %v881
      %v883 = vmul.f32 %v876, 1.442695
      %v884 = vpow.pop %v883
      %v885 = vld [vmem:[%s480] sm:$0xff]
      %v886 = vld [vmem:[%s480 + $0x8] sm:$0xff]
      %v887 = vld [vmem:[%s480 + $0x10] sm:$0xff]
      %v888 = vld [vmem:[%s480 + $0x18] sm:$0xff]
      %v889 = vlaneseq
      %v890 = vand.u32 %v889, 127
      %891 = vset.pattern.permute.xlu0 0
      %892 = vperm.xlu0 %891, %v885
      %v893 = vpop.permute.xlu0 %892
      %894 = vset.pattern.permute.xlu0 0
      %895 = vperm.xlu0 %894, %v886
      %v896 = vpop.permute.xlu0 %895
      %897 = vset.pattern.permute.xlu0 0
      %898 = vperm.xlu0 %897, %v887
      %v899 = vpop.permute.xlu0 %898
      %900 = vset.pattern.permute.xlu0 0
      %901 = vperm.xlu0 %900, %v888
      %v902 = vpop.permute.xlu0 %901
      %vm903 = vcmp.eq.s32.totalorder %v890, %v893
      %vm904 = vcmp.eq.s32.totalorder %v890, %v896
      %vm905 = vcmp.eq.s32.totalorder %v890, %v899
      %vm906 = vcmp.eq.s32.totalorder %v890, %v902
      %v907 = vsel %vm903, 1, 0
      %v908 = vsel %vm904, 1, 0
      %v909 = vsel %vm905, 1, 0
      %v910 = vsel %vm906, 1, 0
      %v911 = vcvt.s32.f32 %v907
      %v912 = vcvt.s32.f32 %v908
      %v913 = vcvt.s32.f32 %v909
      %v914 = vcvt.s32.f32 %v910
      %v915 = vmul.f32 %v873, %v911
      %v916 = vmul.f32 %v874, %v912
      %v917 = vmul.f32 %v875, %v913
      %v918 = vmul.f32 %v876, %v914
      %v919 = vsel %vm828, %v915, 0.0
      %920 = vadd.xlane.f32.xlu0 %v919
      %v921 = vpop.xlane.xlu0 %920
      %v922 = vsel %vm828, %v916, 0.0
      %923 = vadd.xlane.f32.xlu0 %v922
      %v924 = vpop.xlane.xlu0 %923
      %v925 = vsel %vm828, %v917, 0.0
      %926 = vadd.xlane.f32.xlu0 %v925
      %v927 = vpop.xlane.xlu0 %926
      %v928 = vsel %vm828, %v918, 0.0
      %929 = vadd.xlane.f32.xlu0 %v928
      %v930 = vpop.xlane.xlu0 %929
      %v931 = vmul.f32 %v878, %v873
      %v932 = vmul.f32 %v880, %v874
      %v933 = vmul.f32 %v882, %v875
      %v934 = vmul.f32 %v884, %v876
      %v935 = vsel %vm828, %v931, 0.0
      %936 = vadd.xlane.f32.xlu0 %v935
      %v937 = vpop.xlane.xlu0 %936
      %v938 = vsel %vm828, %v932, 0.0
      %939 = vadd.xlane.f32.xlu0 %v938
      %v940 = vpop.xlane.xlu0 %939
      %v941 = vsel %vm828, %v933, 0.0
      %942 = vadd.xlane.f32.xlu0 %v941
      %v943 = vpop.xlane.xlu0 %942
      %v944 = vsel %vm828, %v934, 0.0
      %945 = vadd.xlane.f32.xlu0 %v944
      %v946 = vpop.xlane.xlu0 %945
      %v947 = vsub.f32 0.0, %v937
      %v948 = vsub.f32 0.0, %v940
      %v949 = vsub.f32 0.0, %v943
      %v950 = vsub.f32 0.0, %v946
      %v951 = vld [vmem:[%s9] sm:$0xff]
      %v952 = vld [vmem:[%s9 + $0x8] sm:$0xff]
      %v953 = vld [vmem:[%s9 + $0x10] sm:$0xff]
      %v954 = vld [vmem:[%s9 + $0x18] sm:$0xff]
      %v955 = vld [vmem:[%s9 + $0x20] sm:$0xff]
      %v956 = vld [vmem:[%s9 + $0x28] sm:$0xff]
      %v957 = vld [vmem:[%s9 + $0x30] sm:$0xff]
      %v958 = vld [vmem:[%s9 + $0x38] sm:$0xff]
      %v959 = vld [vmem:[%s9 + $0x40] sm:$0xff]
      %v960 = vld [vmem:[%s9 + $0x48] sm:$0xff]
      %v961 = vld [vmem:[%s9 + $0x50] sm:$0xff]
      %v962 = vld [vmem:[%s9 + $0x58] sm:$0xff]
      %v963 = vld [vmem:[%s9 + $0x60] sm:$0xff]
      %v964 = vld [vmem:[%s9 + $0x68] sm:$0xff]
      %v965 = vld [vmem:[%s9 + $0x70] sm:$0xff]
      %v966 = vld [vmem:[%s9 + $0x78] sm:$0xff]
      %v967 = vld [vmem:[%s10] sm:$0xff]
      %v968 = vld [vmem:[%s10 + $0x8] sm:$0xff]
      %v971 = vlaneseq
      %v972 = vshrl.u32 %v971, 7
      %v973 = vsub.s32 0, %v972
      %v974 = vrot.slane %v967, %v973
      %v975 = vlaneseq
      %v976 = vshrl.u32 %v975, 7
      %v977 = vsub.s32 1, %v976
      %v978 = vrot.slane %v967, %v977
      %v979 = vlaneseq
      %v980 = vshrl.u32 %v979, 7
      %v981 = vsub.s32 2, %v980
      %v982 = vrot.slane %v967, %v981
      %v983 = vlaneseq
      %v984 = vshrl.u32 %v983, 7
      %v985 = vsub.s32 3, %v984
      %v986 = vrot.slane %v967, %v985
      %v987 = vlaneseq
      %v988 = vshrl.u32 %v987, 7
      %v989 = vsub.s32 4, %v988
      %v990 = vrot.slane %v967, %v989
      %v991 = vlaneseq
      %v992 = vshrl.u32 %v991, 7
      %v993 = vsub.s32 5, %v992
      %v994 = vrot.slane %v967, %v993
      %v995 = vlaneseq
      %v996 = vshrl.u32 %v995, 7
      %v997 = vsub.s32 6, %v996
      %v998 = vrot.slane %v967, %v997
      %v999 = vlaneseq
      %v1000 = vshrl.u32 %v999, 7
      %v1001 = vsub.s32 7, %v1000
      %v1002 = vrot.slane %v967, %v1001
      %v1003 = vlaneseq
      %v1004 = vshrl.u32 %v1003, 7
      %v1005 = vsub.s32 0, %v1004
      %v1006 = vrot.slane %v968, %v1005
      %v1007 = vlaneseq
      %v1008 = vshrl.u32 %v1007, 7
      %v1009 = vsub.s32 1, %v1008
      %v1010 = vrot.slane %v968, %v1009
      %v1011 = vlaneseq
      %v1012 = vshrl.u32 %v1011, 7
      %v1013 = vsub.s32 2, %v1012
      %v1014 = vrot.slane %v968, %v1013
      %v1015 = vlaneseq
      %v1016 = vshrl.u32 %v1015, 7
      %v1017 = vsub.s32 3, %v1016
      %v1018 = vrot.slane %v968, %v1017
      %v1019 = vlaneseq
      %v1020 = vshrl.u32 %v1019, 7
      %v1021 = vsub.s32 4, %v1020
      %v1022 = vrot.slane %v968, %v1021
      %v1023 = vlaneseq
      %v1024 = vshrl.u32 %v1023, 7
      %v1025 = vsub.s32 5, %v1024
      %v1026 = vrot.slane %v968, %v1025
      %v1027 = vlaneseq
      %v1028 = vshrl.u32 %v1027, 7
      %v1029 = vsub.s32 6, %v1028
      %v1030 = vrot.slane %v968, %v1029
      %v1031 = vlaneseq
      %v1032 = vshrl.u32 %v1031, 7
      %v1033 = vsub.s32 7, %v1032
      %v1034 = vrot.slane %v968, %v1033
      %vm1051 = vcmask 64512
      %v1053 = vsel %vm1051, %v492, 0
      %v1056 = vsel %vm1051, %v493, 0
      %v1059 = vsel %vm1051, %v494, 0
      %v1062 = vsel %vm1051, %v495, 0
      %1064 = vmatprep.subr.mxu0 %v952
      %1065 = vmatpush1.msra.mxu0 %v951
      %1066 = vmatprep.subr.mxu0 0.0
      %1067 = vmatpush1.msra.mxu0 0.0
      %1068 = vmatprep.subr.mxu0 0.0
      %1069 = vmatpush1.msra.mxu0 0.0
      %1070 = vmatprep.subr.mxu0 0.0
      %1071 = vmatpush1.msra.mxu0 0.0
      %1072 = vmatprep.subr.mxu0 0.0
      %1073 = vmatpush1.msra.mxu0 0.0
      %1074 = vmatprep.subr.mxu0 0.0
      %1075 = vmatpush1.msra.mxu0 0.0
      %1076 = vmatprep.subr.mxu0 0.0
      %1077 = vmatpush1.msra.mxu0 0.0
      %1078 = vmatprep.subr.mxu0 0.0
      %1079 = vmatpush1.msra.mxu0 0.0
      %1080 = vmatprep.subr.mxu0 0.0
      %1081 = vmatpush1.msra.mxu0 0.0
      %1082 = vmatprep.subr.mxu0 0.0
      %1083 = vmatpush1.msra.mxu0 0.0
      %1084 = vmatprep.subr.mxu0 0.0
      %1085 = vmatpush1.msra.mxu0 0.0
      %1086 = vmatprep.subr.mxu0 0.0
      %1087 = vmatpush1.msra.mxu0 0.0
      %1088 = vmatprep.subr.mxu0 0.0
      %1089 = vmatpush1.msra.mxu0 0.0
      %1090 = vmatprep.subr.mxu0 0.0
      %1091 = vmatpush1.msra.mxu0 0.0
      %1092 = vmatprep.subr.mxu0 0.0
      %1093 = vmatpush1.msra.mxu0 0.0
      %1094 = vmatprep.subr.mxu0 0.0
      %1095 = vmatpush1.msra.mxu0 0.0
      %1096 = vmatprep.subr.mxu0 0.0
      %1097 = vmatpush1.msra.mxu0 0.0
      %1098 = vmatprep.subr.mxu0 0.0
      %1099 = vmatpush1.msra.mxu0 0.0
      %1100 = vmatprep.subr.mxu0 0.0
      %1101 = vmatpush1.msra.mxu0 0.0
      %1102 = vmatprep.subr.mxu0 0.0
      %1103 = vmatpush1.msra.mxu0 0.0
      %1104 = vmatprep.subr.mxu0 0.0
      %1105 = vmatpush1.msra.mxu0 0.0
      %1106 = vmatprep.subr.mxu0 0.0
      %1107 = vmatpush1.msra.mxu0 0.0
      %1108 = vmatprep.subr.mxu0 0.0
      %1109 = vmatpush1.msra.mxu0 0.0
      %1110 = vmatprep.subr.mxu0 0.0
      %1111 = vmatpush1.msra.mxu0 0.0
      %1112 = vmatprep.subr.mxu0 0.0
      %1113 = vmatpush1.msra.mxu0 0.0
      %1114 = vmatprep.subr.mxu0 0.0
      %1115 = vmatpush1.msra.mxu0 0.0
      %1116 = vmatprep.subr.mxu0 0.0
      %1117 = vmatpush1.msra.mxu0 0.0
      %1118 = vmatprep.subr.mxu0 0.0
      %1119 = vmatpush1.msra.mxu0 0.0
      %1120 = vmatprep.subr.mxu0 0.0
      %1121 = vmatpush1.msra.mxu0 0.0
      %1122 = vmatprep.subr.mxu0 0.0
      %1123 = vmatpush1.msra.mxu0 0.0
      %1124 = vmatprep.subr.mxu0 0.0
      %1125 = vmatpush1.msra.mxu0 0.0
      %1126 = vmatprep.subr.mxu0 0.0
      %1127 = vmatpush1.msra.mxu0 0.0
      %1128 = vmatprep.mubr.f32.mxu0 0.0
      %1129 = vmatmul.mubr.f32.gmra.mrb[0].mxu0 %v1053
      %v1130 = vpop.f32.mrb[0].mxu0
      %v1131 = vadd.f32 %v974, %v1130
      %v1132 = vpop.f32.mrb[0].mxu0
      %v1133 = vadd.f32 %v978, %v1132
      %1134 = vmatprep.mubr.f32.mxu0 0.0
      %1135 = vmatmul.mubr.f32.gmra.mrb[0].mxu0 %v1056
      %v1136 = vpop.f32.mrb[0].mxu0
      %v1137 = vadd.f32 %v974, %v1136
      %v1138 = vpop.f32.mrb[0].mxu0
      %v1139 = vadd.f32 %v978, %v1138
      %1140 = vmatprep.mubr.f32.mxu0 0.0
      %1141 = vmatmul.mubr.f32.gmra.mrb[0].mxu0 %v1059
      %v1142 = vpop.f32.mrb[0].mxu0
      %v1143 = vadd.f32 %v974, %v1142
      %v1144 = vpop.f32.mrb[0].mxu0
      %v1145 = vadd.f32 %v978, %v1144
      %1146 = vmatprep.mubr.f32.mxu0 0.0
      %1147 = vmatmul.mubr.f32.gmra.mrb[0].mxu0 %v1062
      %v1148 = vpop.f32.mrb[0].mxu0
      %v1149 = vadd.f32 %v974, %v1148
      %v1150 = vpop.f32.mrb[0].mxu0
      %v1151 = vadd.f32 %v978, %v1150
      %1152 = vdwg.mxu0
      %1153 = vmatprep.subr.mxu0 %v954
      %1154 = vmatpush1.msra.mxu0 %v953
      %1155 = vmatprep.subr.mxu0 0.0
      %1156 = vmatpush1.msra.mxu0 0.0
      %1157 = vmatprep.subr.mxu0 0.0
      %1158 = vmatpush1.msra.mxu0 0.0
      %1159 = vmatprep.subr.mxu0 0.0
      %1160 = vmatpush1.msra.mxu0 0.0
      %1161 = vmatprep.subr.mxu0 0.0
      %1162 = vmatpush1.msra.mxu0 0.0
      %1163 = vmatprep.subr.mxu0 0.0
      %1164 = vmatpush1.msra.mxu0 0.0
      %1165 = vmatprep.subr.mxu0 0.0
      %1166 = vmatpush1.msra.mxu0 0.0
      %1167 = vmatprep.subr.mxu0 0.0
      %1168 = vmatpush1.msra.mxu0 0.0
      %1169 = vmatprep.subr.mxu0 0.0
      %1170 = vmatpush1.msra.mxu0 0.0
      %1171 = vmatprep.subr.mxu0 0.0
      %1172 = vmatpush1.msra.mxu0 0.0
      %1173 = vmatprep.subr.mxu0 0.0
      %1174 = vmatpush1.msra.mxu0 0.0
      %1175 = vmatprep.subr.mxu0 0.0
      %1176 = vmatpush1.msra.mxu0 0.0
      %1177 = vmatprep.subr.mxu0 0.0
      %1178 = vmatpush1.msra.mxu0 0.0
      %1179 = vmatprep.subr.mxu0 0.0
      %1180 = vmatpush1.msra.mxu0 0.0
      %1181 = vmatprep.subr.mxu0 0.0
      %1182 = vmatpush1.msra.mxu0 0.0
      %1183 = vmatprep.subr.mxu0 0.0
      %1184 = vmatpush1.msra.mxu0 0.0
      %1185 = vmatprep.subr.mxu0 0.0
      %1186 = vmatpush1.msra.mxu0 0.0
      %1187 = vmatprep.subr.mxu0 0.0
      %1188 = vmatpush1.msra.mxu0 0.0
      %1189 = vmatprep.subr.mxu0 0.0
      %1190 = vmatpush1.msra.mxu0 0.0
      %1191 = vmatprep.subr.mxu0 0.0
      %1192 = vmatpush1.msra.mxu0 0.0
      %1193 = vmatprep.subr.mxu0 0.0
      %1194 = vmatpush1.msra.mxu0 0.0
      %1195 = vmatprep.subr.mxu0 0.0
      %1196 = vmatpush1.msra.mxu0 0.0
      %1197 = vmatprep.subr.mxu0 0.0
      %1198 = vmatpush1.msra.mxu0 0.0
      %1199 = vmatprep.subr.mxu0 0.0
      %1200 = vmatpush1.msra.mxu0 0.0
      %1201 = vmatprep.subr.mxu0 0.0
      %1202 = vmatpush1.msra.mxu0 0.0
      %1203 = vmatprep.subr.mxu0 0.0
      %1204 = vmatpush1.msra.mxu0 0.0
      %1205 = vmatprep.subr.mxu0 0.0
      %1206 = vmatpush1.msra.mxu0 0.0
      %1207 = vmatprep.subr.mxu0 0.0
      %1208 = vmatpush1.msra.mxu0 0.0
      %1209 = vmatprep.subr.mxu0 0.0
      %1210 = vmatpush1.msra.mxu0 0.0
      %1211 = vmatprep.subr.mxu0 0.0
      %1212 = vmatpush1.msra.mxu0 0.0
      %1213 = vmatprep.subr.mxu0 0.0
      %1214 = vmatpush1.msra.mxu0 0.0
      %1215 = vmatprep.subr.mxu0 0.0
      %1216 = vmatpush1.msra.mxu0 0.0
      %1217 = vmatprep.mubr.f32.mxu0 0.0
      %1218 = vmatmul.mubr.f32.gmra.mrb[0].mxu0 %v1053
      %v1219 = vpop.f32.mrb[0].mxu0
      %v1220 = vadd.f32 %v982, %v1219
      %v1221 = vpop.f32.mrb[0].mxu0
      %v1222 = vadd.f32 %v986, %v1221
      %1223 = vmatprep.mubr.f32.mxu0 0.0
      %1224 = vmatmul.mubr.f32.gmra.mrb[0].mxu0 %v1056
      %v1225 = vpop.f32.mrb[0].mxu0
      %v1226 = vadd.f32 %v982, %v1225
      %v1227 = vpop.f32.mrb[0].mxu0
      %v1228 = vadd.f32 %v986, %v1227
      %1229 = vmatprep.mubr.f32.mxu0 0.0
      %1230 = vmatmul.mubr.f32.gmra.mrb[0].mxu0 %v1059
      %v1231 = vpop.f32.mrb[0].mxu0
      %v1232 = vadd.f32 %v982, %v1231
      %v1233 = vpop.f32.mrb[0].mxu0
      %v1234 = vadd.f32 %v986, %v1233
      %1235 = vmatprep.mubr.f32.mxu0 0.0
      %1236 = vmatmul.mubr.f32.gmra.mrb[0].mxu0 %v1062
      %v1237 = vpop.f32.mrb[0].mxu0
      %v1238 = vadd.f32 %v982, %v1237
      %v1239 = vpop.f32.mrb[0].mxu0
      %v1240 = vadd.f32 %v986, %v1239
      %1241 = vdwg.mxu0
      %1242 = vmatprep.subr.mxu0 %v956
      %1243 = vmatpush1.msra.mxu0 %v955
      %1244 = vmatprep.subr.mxu0 0.0
      %1245 = vmatpush1.msra.mxu0 0.0
      %1246 = vmatprep.subr.mxu0 0.0
      %1247 = vmatpush1.msra.mxu0 0.0
      %1248 = vmatprep.subr.mxu0 0.0
      %1249 = vmatpush1.msra.mxu0 0.0
      %1250 = vmatprep.subr.mxu0 0.0
      %1251 = vmatpush1.msra.mxu0 0.0
      %1252 = vmatprep.subr.mxu0 0.0
      %1253 = vmatpush1.msra.mxu0 0.0
      %1254 = vmatprep.subr.mxu0 0.0
      %1255 = vmatpush1.msra.mxu0 0.0
      %1256 = vmatprep.subr.mxu0 0.0
      %1257 = vmatpush1.msra.mxu0 0.0
      %1258 = vmatprep.subr.mxu0 0.0
      %1259 = vmatpush1.msra.mxu0 0.0
      %1260 = vmatprep.subr.mxu0 0.0
      %1261 = vmatpush1.msra.mxu0 0.0
      %1262 = vmatprep.subr.mxu0 0.0
      %1263 = vmatpush1.msra.mxu0 0.0
      %1264 = vmatprep.subr.mxu0 0.0
      %1265 = vmatpush1.msra.mxu0 0.0
      %1266 = vmatprep.subr.mxu0 0.0
      %1267 = vmatpush1.msra.mxu0 0.0
      %1268 = vmatprep.subr.mxu0 0.0
      %1269 = vmatpush1.msra.mxu0 0.0
      %1270 = vmatprep.subr.mxu0 0.0
      %1271 = vmatpush1.msra.mxu0 0.0
      %1272 = vmatprep.subr.mxu0 0.0
      %1273 = vmatpush1.msra.mxu0 0.0
      %1274 = vmatprep.subr.mxu0 0.0
      %1275 = vmatpush1.msra.mxu0 0.0
      %1276 = vmatprep.subr.mxu0 0.0
      %1277 = vmatpush1.msra.mxu0 0.0
      %1278 = vmatprep.subr.mxu0 0.0
      %1279 = vmatpush1.msra.mxu0 0.0
      %1280 = vmatprep.subr.mxu0 0.0
      %1281 = vmatpush1.msra.mxu0 0.0
      %1282 = vmatprep.subr.mxu0 0.0
      %1283 = vmatpush1.msra.mxu0 0.0
      %1284 = vmatprep.subr.mxu0 0.0
      %1285 = vmatpush1.msra.mxu0 0.0
      %1286 = vmatprep.subr.mxu0 0.0
      %1287 = vmatpush1.msra.mxu0 0.0
      %1288 = vmatprep.subr.mxu0 0.0
      %1289 = vmatpush1.msra.mxu0 0.0
      %1290 = vmatprep.subr.mxu0 0.0
      %1291 = vmatpush1.msra.mxu0 0.0
      %1292 = vmatprep.subr.mxu0 0.0
      %1293 = vmatpush1.msra.mxu0 0.0
      %1294 = vmatprep.subr.mxu0 0.0
      %1295 = vmatpush1.msra.mxu0 0.0
      %1296 = vmatprep.subr.mxu0 0.0
      %1297 = vmatpush1.msra.mxu0 0.0
      %1298 = vmatprep.subr.mxu0 0.0
      %1299 = vmatpush1.msra.mxu0 0.0
      %1300 = vmatprep.subr.mxu0 0.0
      %1301 = vmatpush1.msra.mxu0 0.0
      %1302 = vmatprep.subr.mxu0 0.0
      %1303 = vmatpush1.msra.mxu0 0.0
      %1304 = vmatprep.subr.mxu0 0.0
      %1305 = vmatpush1.msra.mxu0 0.0
      %1306 = vmatprep.mubr.f32.mxu0 0.0
      %1307 = vmatmul.mubr.f32.gmra.mrb[0].mxu0 %v1053
      %v1308 = vpop.f32.mrb[0].mxu0
      %v1309 = vadd.f32 %v990, %v1308
      %v1310 = vpop.f32.mrb[0].mxu0
      %v1311 = vadd.f32 %v994, %v1310
      %1312 = vmatprep.mubr.f32.mxu0 0.0
      %1313 = vmatmul.mubr.f32.gmra.mrb[0].mxu0 %v1056
      %v1314 = vpop.f32.mrb[0].mxu0
      %v1315 = vadd.f32 %v990, %v1314
      %v1316 = vpop.f32.mrb[0].mxu0
      %v1317 = vadd.f32 %v994, %v1316
      %1318 = vmatprep.mubr.f32.mxu0 0.0
      %1319 = vmatmul.mubr.f32.gmra.mrb[0].mxu0 %v1059
      %v1320 = vpop.f32.mrb[0].mxu0
      %v1321 = vadd.f32 %v990, %v1320
      %v1322 = vpop.f32.mrb[0].mxu0
      %v1323 = vadd.f32 %v994, %v1322
      %1324 = vmatprep.mubr.f32.mxu0 0.0
      %1325 = vmatmul.mubr.f32.gmra.mrb[0].mxu0 %v1062
      %v1326 = vpop.f32.mrb[0].mxu0
      %v1327 = vadd.f32 %v990, %v1326
      %v1328 = vpop.f32.mrb[0].mxu0
      %v1329 = vadd.f32 %v994, %v1328
      %1330 = vdwg.mxu0
      %1331 = vmatprep.subr.mxu0 %v958
      %1332 = vmatpush1.msra.mxu0 %v957
      %1333 = vmatprep.subr.mxu0 0.0
      %1334 = vmatpush1.msra.mxu0 0.0
      %1335 = vmatprep.subr.mxu0 0.0
      %1336 = vmatpush1.msra.mxu0 0.0
      %1337 = vmatprep.subr.mxu0 0.0
      %1338 = vmatpush1.msra.mxu0 0.0
      %1339 = vmatprep.subr.mxu0 0.0
      %1340 = vmatpush1.msra.mxu0 0.0
      %1341 = vmatprep.subr.mxu0 0.0
      %1342 = vmatpush1.msra.mxu0 0.0
      %1343 = vmatprep.subr.mxu0 0.0
      %1344 = vmatpush1.msra.mxu0 0.0
      %1345 = vmatprep.subr.mxu0 0.0
      %1346 = vmatpush1.msra.mxu0 0.0
      %1347 = vmatprep.subr.mxu0 0.0
      %1348 = vmatpush1.msra.mxu0 0.0
      %1349 = vmatprep.subr.mxu0 0.0
      %1350 = vmatpush1.msra.mxu0 0.0
      %1351 = vmatprep.subr.mxu0 0.0
      %1352 = vmatpush1.msra.mxu0 0.0
      %1353 = vmatprep.subr.mxu0 0.0
      %1354 = vmatpush1.msra.mxu0 0.0
      %1355 = vmatprep.subr.mxu0 0.0
      %1356 = vmatpush1.msra.mxu0 0.0
      %1357 = vmatprep.subr.mxu0 0.0
      %1358 = vmatpush1.msra.mxu0 0.0
      %1359 = vmatprep.subr.mxu0 0.0
      %1360 = vmatpush1.msra.mxu0 0.0
      %1361 = vmatprep.subr.mxu0 0.0
      %1362 = vmatpush1.msra.mxu0 0.0
      %1363 = vmatprep.subr.mxu0 0.0
      %1364 = vmatpush1.msra.mxu0 0.0
      %1365 = vmatprep.subr.mxu0 0.0
      %1366 = vmatpush1.msra.mxu0 0.0
      %1367 = vmatprep.subr.mxu0 0.0
      %1368 = vmatpush1.msra.mxu0 0.0
      %1369 = vmatprep.subr.mxu0 0.0
      %1370 = vmatpush1.msra.mxu0 0.0
      %1371 = vmatprep.subr.mxu0 0.0
      %1372 = vmatpush1.msra.mxu0 0.0
      %1373 = vmatprep.subr.mxu0 0.0
      %1374 = vmatpush1.msra.mxu0 0.0
      %1375 = vmatprep.subr.mxu0 0.0
      %1376 = vmatpush1.msra.mxu0 0.0
      %1377 = vmatprep.subr.mxu0 0.0
      %1378 = vmatpush1.msra.mxu0 0.0
      %1379 = vmatprep.subr.mxu0 0.0
      %1380 = vmatpush1.msra.mxu0 0.0
      %1381 = vmatprep.subr.mxu0 0.0
      %1382 = vmatpush1.msra.mxu0 0.0
      %1383 = vmatprep.subr.mxu0 0.0
      %1384 = vmatpush1.msra.mxu0 0.0
      %1385 = vmatprep.subr.mxu0 0.0
      %1386 = vmatpush1.msra.mxu0 0.0
      %1387 = vmatprep.subr.mxu0 0.0
      %1388 = vmatpush1.msra.mxu0 0.0
      %1389 = vmatprep.subr.mxu0 0.0
      %1390 = vmatpush1.msra.mxu0 0.0
      %1391 = vmatprep.subr.mxu0 0.0
      %1392 = vmatpush1.msra.mxu0 0.0
      %1393 = vmatprep.subr.mxu0 0.0
      %1394 = vmatpush1.msra.mxu0 0.0
      %1395 = vmatprep.mubr.f32.mxu0 0.0
      %1396 = vmatmul.mubr.f32.gmra.mrb[0].mxu0 %v1053
      %v1397 = vpop.f32.mrb[0].mxu0
      %v1398 = vadd.f32 %v998, %v1397
      %v1399 = vpop.f32.mrb[0].mxu0
      %v1400 = vadd.f32 %v1002, %v1399
      %1401 = vmatprep.mubr.f32.mxu0 0.0
      %1402 = vmatmul.mubr.f32.gmra.mrb[0].mxu0 %v1056
      %v1403 = vpop.f32.mrb[0].mxu0
      %v1404 = vadd.f32 %v998, %v1403
      %v1405 = vpop.f32.mrb[0].mxu0
      %v1406 = vadd.f32 %v1002, %v1405
      %1407 = vmatprep.mubr.f32.mxu0 0.0
      %1408 = vmatmul.mubr.f32.gmra.mrb[0].mxu0 %v1059
      %v1409 = vpop.f32.mrb[0].mxu0
      %v1410 = vadd.f32 %v998, %v1409
      %v1411 = vpop.f32.mrb[0].mxu0
      %v1412 = vadd.f32 %v1002, %v1411
      %1413 = vmatprep.mubr.f32.mxu0 0.0
      %1414 = vmatmul.mubr.f32.gmra.mrb[0].mxu0 %v1062
      %v1415 = vpop.f32.mrb[0].mxu0
      %v1416 = vadd.f32 %v998, %v1415
      %v1417 = vpop.f32.mrb[0].mxu0
      %v1418 = vadd.f32 %v1002, %v1417
      %1419 = vdwg.mxu0
      %1420 = vmatprep.subr.mxu0 %v960
      %1421 = vmatpush1.msra.mxu0 %v959
      %1422 = vmatprep.subr.mxu0 0.0
      %1423 = vmatpush1.msra.mxu0 0.0
      %1424 = vmatprep.subr.mxu0 0.0
      %1425 = vmatpush1.msra.mxu0 0.0
      %1426 = vmatprep.subr.mxu0 0.0
      %1427 = vmatpush1.msra.mxu0 0.0
      %1428 = vmatprep.subr.mxu0 0.0
      %1429 = vmatpush1.msra.mxu0 0.0
      %1430 = vmatprep.subr.mxu0 0.0
      %1431 = vmatpush1.msra.mxu0 0.0
      %1432 = vmatprep.subr.mxu0 0.0
      %1433 = vmatpush1.msra.mxu0 0.0
      %1434 = vmatprep.subr.mxu0 0.0
      %1435 = vmatpush1.msra.mxu0 0.0
      %1436 = vmatprep.subr.mxu0 0.0
      %1437 = vmatpush1.msra.mxu0 0.0
      %1438 = vmatprep.subr.mxu0 0.0
      %1439 = vmatpush1.msra.mxu0 0.0
      %1440 = vmatprep.subr.mxu0 0.0
      %1441 = vmatpush1.msra.mxu0 0.0
      %1442 = vmatprep.subr.mxu0 0.0
      %1443 = vmatpush1.msra.mxu0 0.0
      %1444 = vmatprep.subr.mxu0 0.0
      %1445 = vmatpush1.msra.mxu0 0.0
      %1446 = vmatprep.subr.mxu0 0.0
      %1447 = vmatpush1.msra.mxu0 0.0
      %1448 = vmatprep.subr.mxu0 0.0
      %1449 = vmatpush1.msra.mxu0 0.0
      %1450 = vmatprep.subr.mxu0 0.0
      %1451 = vmatpush1.msra.mxu0 0.0
      %1452 = vmatprep.subr.mxu0 0.0
      %1453 = vmatpush1.msra.mxu0 0.0
      %1454 = vmatprep.subr.mxu0 0.0
      %1455 = vmatpush1.msra.mxu0 0.0
      %1456 = vmatprep.subr.mxu0 0.0
      %1457 = vmatpush1.msra.mxu0 0.0
      %1458 = vmatprep.subr.mxu0 0.0
      %1459 = vmatpush1.msra.mxu0 0.0
      %1460 = vmatprep.subr.mxu0 0.0
      %1461 = vmatpush1.msra.mxu0 0.0
      %1462 = vmatprep.subr.mxu0 0.0
      %1463 = vmatpush1.msra.mxu0 0.0
      %1464 = vmatprep.subr.mxu0 0.0
      %1465 = vmatpush1.msra.mxu0 0.0
      %1466 = vmatprep.subr.mxu0 0.0
      %1467 = vmatpush1.msra.mxu0 0.0
      %1468 = vmatprep.subr.mxu0 0.0
      %1469 = vmatpush1.msra.mxu0 0.0
      %1470 = vmatprep.subr.mxu0 0.0
      %1471 = vmatpush1.msra.mxu0 0.0
      %1472 = vmatprep.subr.mxu0 0.0
      %1473 = vmatpush1.msra.mxu0 0.0
      %1474 = vmatprep.subr.mxu0 0.0
      %1475 = vmatpush1.msra.mxu0 0.0
      %1476 = vmatprep.subr.mxu0 0.0
      %1477 = vmatpush1.msra.mxu0 0.0
      %1478 = vmatprep.subr.mxu0 0.0
      %1479 = vmatpush1.msra.mxu0 0.0
      %1480 = vmatprep.subr.mxu0 0.0
      %1481 = vmatpush1.msra.mxu0 0.0
      %1482 = vmatprep.subr.mxu0 0.0
      %1483 = vmatpush1.msra.mxu0 0.0
      %1484 = vmatprep.mubr.f32.mxu0 0.0
      %1485 = vmatmul.mubr.f32.gmra.mrb[0].mxu0 %v1053
      %v1486 = vpop.f32.mrb[0].mxu0
      %v1487 = vadd.f32 %v1006, %v1486
      %v1488 = vpop.f32.mrb[0].mxu0
      %v1489 = vadd.f32 %v1010, %v1488
      %1490 = vmatprep.mubr.f32.mxu0 0.0
      %1491 = vmatmul.mubr.f32.gmra.mrb[0].mxu0 %v1056
      %v1492 = vpop.f32.mrb[0].mxu0
      %v1493 = vadd.f32 %v1006, %v1492
      %v1494 = vpop.f32.mrb[0].mxu0
      %v1495 = vadd.f32 %v1010, %v1494
      %1496 = vmatprep.mubr.f32.mxu0 0.0
      %1497 = vmatmul.mubr.f32.gmra.mrb[0].mxu0 %v1059
      %v1498 = vpop.f32.mrb[0].mxu0
      %v1499 = vadd.f32 %v1006, %v1498
      %v1500 = vpop.f32.mrb[0].mxu0
      %v1501 = vadd.f32 %v1010, %v1500
      %1502 = vmatprep.mubr.f32.mxu0 0.0
      %1503 = vmatmul.mubr.f32.gmra.mrb[0].mxu0 %v1062
      %v1504 = vpop.f32.mrb[0].mxu0
      %v1505 = vadd.f32 %v1006, %v1504
      %v1506 = vpop.f32.mrb[0].mxu0
      %v1507 = vadd.f32 %v1010, %v1506
      %1508 = vdwg.mxu0
      %1509 = vmatprep.subr.mxu0 %v962
      %1510 = vmatpush1.msra.mxu0 %v961
      %1511 = vmatprep.subr.mxu0 0.0
      %1512 = vmatpush1.msra.mxu0 0.0
      %1513 = vmatprep.subr.mxu0 0.0
      %1514 = vmatpush1.msra.mxu0 0.0
      %1515 = vmatprep.subr.mxu0 0.0
      %1516 = vmatpush1.msra.mxu0 0.0
      %1517 = vmatprep.subr.mxu0 0.0
      %1518 = vmatpush1.msra.mxu0 0.0
      %1519 = vmatprep.subr.mxu0 0.0
      %1520 = vmatpush1.msra.mxu0 0.0
      %1521 = vmatprep.subr.mxu0 0.0
      %1522 = vmatpush1.msra.mxu0 0.0
      %1523 = vmatprep.subr.mxu0 0.0
      %1524 = vmatpush1.msra.mxu0 0.0
      %1525 = vmatprep.subr.mxu0 0.0
      %1526 = vmatpush1.msra.mxu0 0.0
      %1527 = vmatprep.subr.mxu0 0.0
      %1528 = vmatpush1.msra.mxu0 0.0
      %1529 = vmatprep.subr.mxu0 0.0
      %1530 = vmatpush1.msra.mxu0 0.0
      %1531 = vmatprep.subr.mxu0 0.0
      %1532 = vmatpush1.msra.mxu0 0.0
      %1533 = vmatprep.subr.mxu0 0.0
      %1534 = vmatpush1.msra.mxu0 0.0
      %1535 = vmatprep.subr.mxu0 0.0
      %1536 = vmatpush1.msra.mxu0 0.0
      %1537 = vmatprep.subr.mxu0 0.0
      %1538 = vmatpush1.msra.mxu0 0.0
      %1539 = vmatprep.subr.mxu0 0.0
      %1540 = vmatpush1.msra.mxu0 0.0
      %1541 = vmatprep.subr.mxu0 0.0
      %1542 = vmatpush1.msra.mxu0 0.0
      %1543 = vmatprep.subr.mxu0 0.0
      %1544 = vmatpush1.msra.mxu0 0.0
      %1545 = vmatprep.subr.mxu0 0.0
      %1546 = vmatpush1.msra.mxu0 0.0
      %1547 = vmatprep.subr.mxu0 0.0
      %1548 = vmatpush1.msra.mxu0 0.0
      %1549 = vmatprep.subr.mxu0 0.0
      %1550 = vmatpush1.msra.mxu0 0.0
      %1551 = vmatprep.subr.mxu0 0.0
      %1552 = vmatpush1.msra.mxu0 0.0
      %1553 = vmatprep.subr.mxu0 0.0
      %1554 = vmatpush1.msra.mxu0 0.0
      %1555 = vmatprep.subr.mxu0 0.0
      %1556 = vmatpush1.msra.mxu0 0.0
      %1557 = vmatprep.subr.mxu0 0.0
      %1558 = vmatpush1.msra.mxu0 0.0
      %1559 = vmatprep.subr.mxu0 0.0
      %1560 = vmatpush1.msra.mxu0 0.0
      %1561 = vmatprep.subr.mxu0 0.0
      %1562 = vmatpush1.msra.mxu0 0.0
      %1563 = vmatprep.subr.mxu0 0.0
      %1564 = vmatpush1.msra.mxu0 0.0
      %1565 = vmatprep.subr.mxu0 0.0
      %1566 = vmatpush1.msra.mxu0 0.0
      %1567 = vmatprep.subr.mxu0 0.0
      %1568 = vmatpush1.msra.mxu0 0.0
      %1569 = vmatprep.subr.mxu0 0.0
      %1570 = vmatpush1.msra.mxu0 0.0
      %1571 = vmatprep.subr.mxu0 0.0
      %1572 = vmatpush1.msra.mxu0 0.0
      %1573 = vmatprep.mubr.f32.mxu0 0.0
      %1574 = vmatmul.mubr.f32.gmra.mrb[0].mxu0 %v1053
      %v1575 = vpop.f32.mrb[0].mxu0
      %v1576 = vadd.f32 %v1014, %v1575
      %v1577 = vpop.f32.mrb[0].mxu0
      %v1578 = vadd.f32 %v1018, %v1577
      %1579 = vmatprep.mubr.f32.mxu0 0.0
      %1580 = vmatmul.mubr.f32.gmra.mrb[0].mxu0 %v1056
      %v1581 = vpop.f32.mrb[0].mxu0
      %v1582 = vadd.f32 %v1014, %v1581
      %v1583 = vpop.f32.mrb[0].mxu0
      %v1584 = vadd.f32 %v1018, %v1583
      %1585 = vmatprep.mubr.f32.mxu0 0.0
      %1586 = vmatmul.mubr.f32.gmra.mrb[0].mxu0 %v1059
      %v1587 = vpop.f32.mrb[0].mxu0
      %v1588 = vadd.f32 %v1014, %v1587
      %v1589 = vpop.f32.mrb[0].mxu0
      %v1590 = vadd.f32 %v1018, %v1589
      %1591 = vmatprep.mubr.f32.mxu0 0.0
      %1592 = vmatmul.mubr.f32.gmra.mrb[0].mxu0 %v1062
      %v1593 = vpop.f32.mrb[0].mxu0
      %v1594 = vadd.f32 %v1014, %v1593
      %v1595 = vpop.f32.mrb[0].mxu0
      %v1596 = vadd.f32 %v1018, %v1595
      %1597 = vdwg.mxu0
      %1598 = vmatprep.subr.mxu0 %v964
      %1599 = vmatpush1.msra.mxu0 %v963
      %1600 = vmatprep.subr.mxu0 0.0
      %1601 = vmatpush1.msra.mxu0 0.0
      %1602 = vmatprep.subr.mxu0 0.0
      %1603 = vmatpush1.msra.mxu0 0.0
      %1604 = vmatprep.subr.mxu0 0.0
      %1605 = vmatpush1.msra.mxu0 0.0
      %1606 = vmatprep.subr.mxu0 0.0
      %1607 = vmatpush1.msra.mxu0 0.0
      %1608 = vmatprep.subr.mxu0 0.0
      %1609 = vmatpush1.msra.mxu0 0.0
      %1610 = vmatprep.subr.mxu0 0.0
      %1611 = vmatpush1.msra.mxu0 0.0
      %1612 = vmatprep.subr.mxu0 0.0
      %1613 = vmatpush1.msra.mxu0 0.0
      %1614 = vmatprep.subr.mxu0 0.0
      %1615 = vmatpush1.msra.mxu0 0.0
      %1616 = vmatprep.subr.mxu0 0.0
      %1617 = vmatpush1.msra.mxu0 0.0
      %1618 = vmatprep.subr.mxu0 0.0
      %1619 = vmatpush1.msra.mxu0 0.0
      %1620 = vmatprep.subr.mxu0 0.0
      %1621 = vmatpush1.msra.mxu0 0.0
      %1622 = vmatprep.subr.mxu0 0.0
      %1623 = vmatpush1.msra.mxu0 0.0
      %1624 = vmatprep.subr.mxu0 0.0
      %1625 = vmatpush1.msra.mxu0 0.0
      %1626 = vmatprep.subr.mxu0 0.0
      %1627 = vmatpush1.msra.mxu0 0.0
      %1628 = vmatprep.subr.mxu0 0.0
      %1629 = vmatpush1.msra.mxu0 0.0
      %1630 = vmatprep.subr.mxu0 0.0
      %1631 = vmatpush1.msra.mxu0 0.0
      %1632 = vmatprep.subr.mxu0 0.0
      %1633 = vmatpush1.msra.mxu0 0.0
      %1634 = vmatprep.subr.mxu0 0.0
      %1635 = vmatpush1.msra.mxu0 0.0
      %1636 = vmatprep.subr.mxu0 0.0
      %1637 = vmatpush1.msra.mxu0 0.0
      %1638 = vmatprep.subr.mxu0 0.0
      %1639 = vmatpush1.msra.mxu0 0.0
      %1640 = vmatprep.subr.mxu0 0.0
      %1641 = vmatpush1.msra.mxu0 0.0
      %1642 = vmatprep.subr.mxu0 0.0
      %1643 = vmatpush1.msra.mxu0 0.0
      %1644 = vmatprep.subr.mxu0 0.0
      %1645 = vmatpush1.msra.mxu0 0.0
      %1646 = vmatprep.subr.mxu0 0.0
      %1647 = vmatpush1.msra.mxu0 0.0
      %1648 = vmatprep.subr.mxu0 0.0
      %1649 = vmatpush1.msra.mxu0 0.0
      %1650 = vmatprep.subr.mxu0 0.0
      %1651 = vmatpush1.msra.mxu0 0.0
      %1652 = vmatprep.subr.mxu0 0.0
      %1653 = vmatpush1.msra.mxu0 0.0
      %1654 = vmatprep.subr.mxu0 0.0
      %1655 = vmatpush1.msra.mxu0 0.0
      %1656 = vmatprep.subr.mxu0 0.0
      %1657 = vmatpush1.msra.mxu0 0.0
      %1658 = vmatprep.subr.mxu0 0.0
      %1659 = vmatpush1.msra.mxu0 0.0
      %1660 = vmatprep.subr.mxu0 0.0
      %1661 = vmatpush1.msra.mxu0 0.0
      %1662 = vmatprep.mubr.f32.mxu0 0.0
      %1663 = vmatmul.mubr.f32.gmra.mrb[0].mxu0 %v1053
      %v1664 = vpop.f32.mrb[0].mxu0
      %v1665 = vadd.f32 %v1022, %v1664
      %v1666 = vpop.f32.mrb[0].mxu0
      %v1667 = vadd.f32 %v1026, %v1666
      %1668 = vmatprep.mubr.f32.mxu0 0.0
      %1669 = vmatmul.mubr.f32.gmra.mrb[0].mxu0 %v1056
      %v1670 = vpop.f32.mrb[0].mxu0
      %v1671 = vadd.f32 %v1022, %v1670
      %v1672 = vpop.f32.mrb[0].mxu0
      %v1673 = vadd.f32 %v1026, %v1672
      %1674 = vmatprep.mubr.f32.mxu0 0.0
      %1675 = vmatmul.mubr.f32.gmra.mrb[0].mxu0 %v1059
      %v1676 = vpop.f32.mrb[0].mxu0
      %v1677 = vadd.f32 %v1022, %v1676
      %v1678 = vpop.f32.mrb[0].mxu0
      %v1679 = vadd.f32 %v1026, %v1678
      %1680 = vmatprep.mubr.f32.mxu0 0.0
      %1681 = vmatmul.mubr.f32.gmra.mrb[0].mxu0 %v1062
      %v1682 = vpop.f32.mrb[0].mxu0
      %v1683 = vadd.f32 %v1022, %v1682
      %v1684 = vpop.f32.mrb[0].mxu0
      %v1685 = vadd.f32 %v1026, %v1684
      %1686 = vdwg.mxu0
      %1687 = vmatprep.subr.mxu0 %v966
      %1688 = vmatpush1.msra.mxu0 %v965
      %1689 = vmatprep.subr.mxu0 0.0
      %1690 = vmatpush1.msra.mxu0 0.0
      %1691 = vmatprep.subr.mxu0 0.0
      %1692 = vmatpush1.msra.mxu0 0.0
      %1693 = vmatprep.subr.mxu0 0.0
      %1694 = vmatpush1.msra.mxu0 0.0
      %1695 = vmatprep.subr.mxu0 0.0
      %1696 = vmatpush1.msra.mxu0 0.0
      %1697 = vmatprep.subr.mxu0 0.0
      %1698 = vmatpush1.msra.mxu0 0.0
      %1699 = vmatprep.subr.mxu0 0.0
      %1700 = vmatpush1.msra.mxu0 0.0
      %1701 = vmatprep.subr.mxu0 0.0
      %1702 = vmatpush1.msra.mxu0 0.0
      %1703 = vmatprep.subr.mxu0 0.0
      %1704 = vmatpush1.msra.mxu0 0.0
      %1705 = vmatprep.subr.mxu0 0.0
      %1706 = vmatpush1.msra.mxu0 0.0
      %1707 = vmatprep.subr.mxu0 0.0
      %1708 = vmatpush1.msra.mxu0 0.0
      %1709 = vmatprep.subr.mxu0 0.0
      %1710 = vmatpush1.msra.mxu0 0.0
      %1711 = vmatprep.subr.mxu0 0.0
      %1712 = vmatpush1.msra.mxu0 0.0
      %1713 = vmatprep.subr.mxu0 0.0
      %1714 = vmatpush1.msra.mxu0 0.0
      %1715 = vmatprep.subr.mxu0 0.0
      %1716 = vmatpush1.msra.mxu0 0.0
      %1717 = vmatprep.subr.mxu0 0.0
      %1718 = vmatpush1.msra.mxu0 0.0
      %1719 = vmatprep.subr.mxu0 0.0
      %1720 = vmatpush1.msra.mxu0 0.0
      %1721 = vmatprep.subr.mxu0 0.0
      %1722 = vmatpush1.msra.mxu0 0.0
      %1723 = vmatprep.subr.mxu0 0.0
      %1724 = vmatpush1.msra.mxu0 0.0
      %1725 = vmatprep.subr.mxu0 0.0
      %1726 = vmatpush1.msra.mxu0 0.0
      %1727 = vmatprep.subr.mxu0 0.0
      %1728 = vmatpush1.msra.mxu0 0.0
      %1729 = vmatprep.subr.mxu0 0.0
      %1730 = vmatpush1.msra.mxu0 0.0
      %1731 = vmatprep.subr.mxu0 0.0
      %1732 = vmatpush1.msra.mxu0 0.0
      %1733 = vmatprep.subr.mxu0 0.0
      %1734 = vmatpush1.msra.mxu0 0.0
      %1735 = vmatprep.subr.mxu0 0.0
      %1736 = vmatpush1.msra.mxu0 0.0
      %1737 = vmatprep.subr.mxu0 0.0
      %1738 = vmatpush1.msra.mxu0 0.0
      %1739 = vmatprep.subr.mxu0 0.0
      %1740 = vmatpush1.msra.mxu0 0.0
      %1741 = vmatprep.subr.mxu0 0.0
      %1742 = vmatpush1.msra.mxu0 0.0
      %1743 = vmatprep.subr.mxu0 0.0
      %1744 = vmatpush1.msra.mxu0 0.0
      %1745 = vmatprep.subr.mxu0 0.0
      %1746 = vmatpush1.msra.mxu0 0.0
      %1747 = vmatprep.subr.mxu0 0.0
      %1748 = vmatpush1.msra.mxu0 0.0
      %1749 = vmatprep.subr.mxu0 0.0
      %1750 = vmatpush1.msra.mxu0 0.0
      %1751 = vmatprep.mubr.f32.mxu0 0.0
      %1752 = vmatmul.mubr.f32.gmra.mrb[0].mxu0 %v1053
      %v1753 = vpop.f32.mrb[0].mxu0
      %v1754 = vadd.f32 %v1030, %v1753
      %v1755 = vpop.f32.mrb[0].mxu0
      %v1756 = vadd.f32 %v1034, %v1755
      %1757 = vmatprep.mubr.f32.mxu0 0.0
      %1758 = vmatmul.mubr.f32.gmra.mrb[0].mxu0 %v1056
      %v1759 = vpop.f32.mrb[0].mxu0
      %v1760 = vadd.f32 %v1030, %v1759
      %v1761 = vpop.f32.mrb[0].mxu0
      %v1762 = vadd.f32 %v1034, %v1761
      %1763 = vmatprep.mubr.f32.mxu0 0.0
      %1764 = vmatmul.mubr.f32.gmra.mrb[0].mxu0 %v1059
      %v1765 = vpop.f32.mrb[0].mxu0
      %v1766 = vadd.f32 %v1030, %v1765
      %v1767 = vpop.f32.mrb[0].mxu0
      %v1768 = vadd.f32 %v1034, %v1767
      %1769 = vmatprep.mubr.f32.mxu0 0.0
      %1770 = vmatmul.mubr.f32.gmra.mrb[0].mxu0 %v1062
      %v1771 = vpop.f32.mrb[0].mxu0
      %v1772 = vadd.f32 %v1030, %v1771
      %v1773 = vpop.f32.mrb[0].mxu0
      %v1774 = vadd.f32 %v1034, %v1773
      %1775 = vdwg.mxu0
      %v1776 = vld [vmem:[%s11] sm:$0xff]
      %v1777 = vld [vmem:[%s11 + $0x8] sm:$0xff]
      %v1778 = vld [vmem:[%s11 + $0x10] sm:$0xff]
      %v1779 = vld [vmem:[%s12] sm:$0x7]
      %v1781 = vlaneseq
      %v1782 = vshrl.u32 %v1781, 7
      %v1783 = vsub.s32 0, %v1782
      %v1784 = vrot.slane %v1779, %v1783
      %v1785 = vlaneseq
      %v1786 = vshrl.u32 %v1785, 7
      %v1787 = vsub.s32 1, %v1786
      %v1788 = vrot.slane %v1779, %v1787
      %v1789 = vlaneseq
      %v1790 = vshrl.u32 %v1789, 7
      %v1791 = vsub.s32 2, %v1790
      %v1792 = vrot.slane %v1779, %v1791
      %1796 = vmatprep.subr.mxu0 %v1777
      %1797 = vmatpush1.msra.mxu0 %v1776
      %1798 = vmatprep.subr.mxu0 0.0
      %1799 = vmatpush1.msra.mxu0 0.0
      %1800 = vmatprep.subr.mxu0 0.0
      %1801 = vmatpush1.msra.mxu0 0.0
      %1802 = vmatprep.subr.mxu0 0.0
      %1803 = vmatpush1.msra.mxu0 0.0
      %1804 = vmatprep.subr.mxu0 0.0
      %1805 = vmatpush1.msra.mxu0 0.0
      %1806 = vmatprep.subr.mxu0 0.0
      %1807 = vmatpush1.msra.mxu0 0.0
      %1808 = vmatprep.subr.mxu0 0.0
      %1809 = vmatpush1.msra.mxu0 0.0
      %1810 = vmatprep.subr.mxu0 0.0
      %1811 = vmatpush1.msra.mxu0 0.0
      %1812 = vmatprep.subr.mxu0 0.0
      %1813 = vmatpush1.msra.mxu0 0.0
      %1814 = vmatprep.subr.mxu0 0.0
      %1815 = vmatpush1.msra.mxu0 0.0
      %1816 = vmatprep.subr.mxu0 0.0
      %1817 = vmatpush1.msra.mxu0 0.0
      %1818 = vmatprep.subr.mxu0 0.0
      %1819 = vmatpush1.msra.mxu0 0.0
      %1820 = vmatprep.subr.mxu0 0.0
      %1821 = vmatpush1.msra.mxu0 0.0
      %1822 = vmatprep.subr.mxu0 0.0
      %1823 = vmatpush1.msra.mxu0 0.0
      %1824 = vmatprep.subr.mxu0 0.0
      %1825 = vmatpush1.msra.mxu0 0.0
      %1826 = vmatprep.subr.mxu0 0.0
      %1827 = vmatpush1.msra.mxu0 0.0
      %1828 = vmatprep.subr.mxu0 0.0
      %1829 = vmatpush1.msra.mxu0 0.0
      %1830 = vmatprep.subr.mxu0 0.0
      %1831 = vmatpush1.msra.mxu0 0.0
      %1832 = vmatprep.subr.mxu0 0.0
      %1833 = vmatpush1.msra.mxu0 0.0
      %1834 = vmatprep.subr.mxu0 0.0
      %1835 = vmatpush1.msra.mxu0 0.0
      %1836 = vmatprep.subr.mxu0 0.0
      %1837 = vmatpush1.msra.mxu0 0.0
      %1838 = vmatprep.subr.mxu0 0.0
      %1839 = vmatpush1.msra.mxu0 0.0
      %1840 = vmatprep.subr.mxu0 0.0
      %1841 = vmatpush1.msra.mxu0 0.0
      %1842 = vmatprep.subr.mxu0 0.0
      %1843 = vmatpush1.msra.mxu0 0.0
      %1844 = vmatprep.subr.mxu0 0.0
      %1845 = vmatpush1.msra.mxu0 0.0
      %1846 = vmatprep.subr.mxu0 0.0
      %1847 = vmatpush1.msra.mxu0 0.0
      %1848 = vmatprep.subr.mxu0 0.0
      %1849 = vmatpush1.msra.mxu0 0.0
      %1850 = vmatprep.subr.mxu0 0.0
      %1851 = vmatpush1.msra.mxu0 0.0
      %1852 = vmatprep.subr.mxu0 0.0
      %1853 = vmatpush1.msra.mxu0 0.0
      %1854 = vmatprep.subr.mxu0 0.0
      %1855 = vmatpush1.msra.mxu0 0.0
      %1856 = vmatprep.subr.mxu0 0.0
      %1857 = vmatpush1.msra.mxu0 0.0
      %1858 = vmatprep.subr.mxu0 0.0
      %1859 = vmatpush1.msra.mxu0 0.0
      %1860 = vmatprep.mubr.f32.mxu0 0.0
      %1861 = vmatmul.mubr.f32.gmra.mrb[0].mxu0 %v1053
      %v1862 = vpop.f32.mrb[0].mxu0
      %v1863 = vadd.f32 %v1784, %v1862
      %v1864 = vpop.f32.mrb[0].mxu0
      %v1865 = vadd.f32 %v1788, %v1864
      %1866 = vmatprep.mubr.f32.mxu0 0.0
      %1867 = vmatmul.mubr.f32.gmra.mrb[0].mxu0 %v1056
      %v1868 = vpop.f32.mrb[0].mxu0
      %v1869 = vadd.f32 %v1784, %v1868
      %v1870 = vpop.f32.mrb[0].mxu0
      %v1871 = vadd.f32 %v1788, %v1870
      %1872 = vmatprep.mubr.f32.mxu0 0.0
      %1873 = vmatmul.mubr.f32.gmra.mrb[0].mxu0 %v1059
      %v1874 = vpop.f32.mrb[0].mxu0
      %v1875 = vadd.f32 %v1784, %v1874
      %v1876 = vpop.f32.mrb[0].mxu0
      %v1877 = vadd.f32 %v1788, %v1876
      %1878 = vmatprep.mubr.f32.mxu0 0.0
      %1879 = vmatmul.mubr.f32.gmra.mrb[0].mxu0 %v1062
      %v1880 = vpop.f32.mrb[0].mxu0
      %v1881 = vadd.f32 %v1784, %v1880
      %v1882 = vpop.f32.mrb[0].mxu0
      %v1883 = vadd.f32 %v1788, %v1882
      %1884 = vdwg.mxu0
      %1885 = vmatprep.subr.mxu0 0.0
      %1886 = vmatpush1.msra.mxu0 %v1778
      %1887 = vmatprep.subr.mxu0 0.0
      %1888 = vmatpush1.msra.mxu0 0.0
      %1889 = vmatprep.subr.mxu0 0.0
      %1890 = vmatpush1.msra.mxu0 0.0
      %1891 = vmatprep.subr.mxu0 0.0
      %1892 = vmatpush1.msra.mxu0 0.0
      %1893 = vmatprep.subr.mxu0 0.0
      %1894 = vmatpush1.msra.mxu0 0.0
      %1895 = vmatprep.subr.mxu0 0.0
      %1896 = vmatpush1.msra.mxu0 0.0
      %1897 = vmatprep.subr.mxu0 0.0
      %1898 = vmatpush1.msra.mxu0 0.0
      %1899 = vmatprep.subr.mxu0 0.0
      %1900 = vmatpush1.msra.mxu0 0.0
      %1901 = vmatprep.subr.mxu0 0.0
      %1902 = vmatpush1.msra.mxu0 0.0
      %1903 = vmatprep.subr.mxu0 0.0
      %1904 = vmatpush1.msra.mxu0 0.0
      %1905 = vmatprep.subr.mxu0 0.0
      %1906 = vmatpush1.msra.mxu0 0.0
      %1907 = vmatprep.subr.mxu0 0.0
      %1908 = vmatpush1.msra.mxu0 0.0
      %1909 = vmatprep.subr.mxu0 0.0
      %1910 = vmatpush1.msra.mxu0 0.0
      %1911 = vmatprep.subr.mxu0 0.0
      %1912 = vmatpush1.msra.mxu0 0.0
      %1913 = vmatprep.subr.mxu0 0.0
      %1914 = vmatpush1.msra.mxu0 0.0
      %1915 = vmatprep.subr.mxu0 0.0
      %1916 = vmatpush1.msra.mxu0 0.0
      %1917 = vmatprep.subr.mxu0 0.0
      %1918 = vmatpush1.msra.mxu0 0.0
      %1919 = vmatprep.subr.mxu0 0.0
      %1920 = vmatpush1.msra.mxu0 0.0
      %1921 = vmatprep.subr.mxu0 0.0
      %1922 = vmatpush1.msra.mxu0 0.0
      %1923 = vmatprep.subr.mxu0 0.0
      %1924 = vmatpush1.msra.mxu0 0.0
      %1925 = vmatprep.subr.mxu0 0.0
      %1926 = vmatpush1.msra.mxu0 0.0
      %1927 = vmatprep.subr.mxu0 0.0
      %1928 = vmatpush1.msra.mxu0 0.0
      %1929 = vmatprep.subr.mxu0 0.0
      %1930 = vmatpush1.msra.mxu0 0.0
      %1931 = vmatprep.subr.mxu0 0.0
      %1932 = vmatpush1.msra.mxu0 0.0
      %1933 = vmatprep.subr.mxu0 0.0
      %1934 = vmatpush1.msra.mxu0 0.0
      %1935 = vmatprep.subr.mxu0 0.0
      %1936 = vmatpush1.msra.mxu0 0.0
      %1937 = vmatprep.subr.mxu0 0.0
      %1938 = vmatpush1.msra.mxu0 0.0
      %1939 = vmatprep.subr.mxu0 0.0
      %1940 = vmatpush1.msra.mxu0 0.0
      %1941 = vmatprep.subr.mxu0 0.0
      %1942 = vmatpush1.msra.mxu0 0.0
      %1943 = vmatprep.subr.mxu0 0.0
      %1944 = vmatpush1.msra.mxu0 0.0
      %1945 = vmatprep.subr.mxu0 0.0
      %1946 = vmatpush1.msra.mxu0 0.0
      %1947 = vmatprep.subr.mxu0 0.0
      %1948 = vmatpush1.msra.mxu0 0.0
      %1949 = vmatprep.mubr.f32.mxu0 0.0
      %1950 = vmatmul.mubr.f32.gmra.mrb[0].mxu0 %v1053
      %v1951 = vpop.f32.mrb[0].mxu0
      %v1952 = vadd.f32 %v1792, %v1951
      %v1953 = vpop.f32.mrb[0].mxu0
      %1954 = vmatprep.mubr.f32.mxu0 0.0
      %1955 = vmatmul.mubr.f32.gmra.mrb[0].mxu0 %v1056
      %v1956 = vpop.f32.mrb[0].mxu0
      %v1957 = vadd.f32 %v1792, %v1956
      %v1958 = vpop.f32.mrb[0].mxu0
      %1959 = vmatprep.mubr.f32.mxu0 0.0
      %1960 = vmatmul.mubr.f32.gmra.mrb[0].mxu0 %v1059
      %v1961 = vpop.f32.mrb[0].mxu0
      %v1962 = vadd.f32 %v1792, %v1961
      %v1963 = vpop.f32.mrb[0].mxu0
      %1964 = vmatprep.mubr.f32.mxu0 0.0
      %1965 = vmatmul.mubr.f32.gmra.mrb[0].mxu0 %v1062
      %v1966 = vpop.f32.mrb[0].mxu0
      %v1967 = vadd.f32 %v1792, %v1966
      %v1968 = vpop.f32.mrb[0].mxu0
      %1969 = vdwg.mxu0
      %1970 = vset.pattern.permute.xlu0 0
      %1971 = vperm.xlu0 %1970, %v488
      %v1972 = vpop.permute.xlu0 %1971
      %1974 = vset.pattern.permute.xlu0 0
      %1975 = vperm.xlu0 %1974, %v489
      %v1976 = vpop.permute.xlu0 %1975
      %1978 = vset.pattern.permute.xlu0 0
      %1979 = vperm.xlu0 %1978, %v490
      %v1980 = vpop.permute.xlu0 %1979
      %1982 = vset.pattern.permute.xlu0 0
      %1983 = vperm.xlu0 %1982, %v491
      %v1984 = vpop.permute.xlu0 %1983
      %v1986 = vmul.f32 %v1972, %v1131
      %v1987 = vmul.f32 %v1976, %v1137
      %v1988 = vmul.f32 %v1980, %v1143
      %v1989 = vmul.f32 %v1984, %v1149
      %1990 = vset.pattern.permute.xlu0 1
      %1991 = vperm.xlu0 %1990, %v488
      %v1992 = vpop.permute.xlu0 %1991
      %1994 = vset.pattern.permute.xlu0 1
      %1995 = vperm.xlu0 %1994, %v489
      %v1996 = vpop.permute.xlu0 %1995
      %1998 = vset.pattern.permute.xlu0 1
      %1999 = vperm.xlu0 %1998, %v490
      %v2000 = vpop.permute.xlu0 %1999
      %2002 = vset.pattern.permute.xlu0 1
      %2003 = vperm.xlu0 %2002, %v491
      %v2004 = vpop.permute.xlu0 %2003
      %v2006 = vmul.f32 %v1992, %v1133
      %v2007 = vmul.f32 %v1996, %v1139
      %v2008 = vmul.f32 %v2000, %v1145
      %v2009 = vmul.f32 %v2004, %v1151
      %2010 = vset.pattern.permute.xlu0 2
      %2011 = vperm.xlu0 %2010, %v488
      %v2012 = vpop.permute.xlu0 %2011
      %2014 = vset.pattern.permute.xlu0 2
      %2015 = vperm.xlu0 %2014, %v489
      %v2016 = vpop.permute.xlu0 %2015
      %2018 = vset.pattern.permute.xlu0 2
      %2019 = vperm.xlu0 %2018, %v490
      %v2020 = vpop.permute.xlu0 %2019
      %2022 = vset.pattern.permute.xlu0 2
      %2023 = vperm.xlu0 %2022, %v491
      %v2024 = vpop.permute.xlu0 %2023
      %v2026 = vmul.f32 %v2012, %v1220
      %v2027 = vmul.f32 %v2016, %v1226
      %v2028 = vmul.f32 %v2020, %v1232
      %v2029 = vmul.f32 %v2024, %v1238
      %2030 = vset.pattern.permute.xlu0 3
      %2031 = vperm.xlu0 %2030, %v488
      %v2032 = vpop.permute.xlu0 %2031
      %2034 = vset.pattern.permute.xlu0 3
      %2035 = vperm.xlu0 %2034, %v489
      %v2036 = vpop.permute.xlu0 %2035
      %2038 = vset.pattern.permute.xlu0 3
      %2039 = vperm.xlu0 %2038, %v490
      %v2040 = vpop.permute.xlu0 %2039
      %2042 = vset.pattern.permute.xlu0 3
      %2043 = vperm.xlu0 %2042, %v491
      %v2044 = vpop.permute.xlu0 %2043
      %v2046 = vmul.f32 %v2032, %v1222
      %v2047 = vmul.f32 %v2036, %v1228
      %v2048 = vmul.f32 %v2040, %v1234
      %v2049 = vmul.f32 %v2044, %v1240
      %2050 = vset.pattern.permute.xlu0 4
      %2051 = vperm.xlu0 %2050, %v488
      %v2052 = vpop.permute.xlu0 %2051
      %2054 = vset.pattern.permute.xlu0 4
      %2055 = vperm.xlu0 %2054, %v489
      %v2056 = vpop.permute.xlu0 %2055
      %2058 = vset.pattern.permute.xlu0 4
      %2059 = vperm.xlu0 %2058, %v490
      %v2060 = vpop.permute.xlu0 %2059
      %2062 = vset.pattern.permute.xlu0 4
      %2063 = vperm.xlu0 %2062, %v491
      %v2064 = vpop.permute.xlu0 %2063
      %v2066 = vmul.f32 %v2052, %v1309
      %v2067 = vmul.f32 %v2056, %v1315
      %v2068 = vmul.f32 %v2060, %v1321
      %v2069 = vmul.f32 %v2064, %v1327
      %2070 = vset.pattern.permute.xlu0 5
      %2071 = vperm.xlu0 %2070, %v488
      %v2072 = vpop.permute.xlu0 %2071
      %2074 = vset.pattern.permute.xlu0 5
      %2075 = vperm.xlu0 %2074, %v489
      %v2076 = vpop.permute.xlu0 %2075
      %2078 = vset.pattern.permute.xlu0 5
      %2079 = vperm.xlu0 %2078, %v490
      %v2080 = vpop.permute.xlu0 %2079
      %2082 = vset.pattern.permute.xlu0 5
      %2083 = vperm.xlu0 %2082, %v491
      %v2084 = vpop.permute.xlu0 %2083
      %v2086 = vmul.f32 %v2072, %v1311
      %v2087 = vmul.f32 %v2076, %v1317
      %v2088 = vmul.f32 %v2080, %v1323
      %v2089 = vmul.f32 %v2084, %v1329
      %2090 = vset.pattern.permute.xlu0 6
      %2091 = vperm.xlu0 %2090, %v488
      %v2092 = vpop.permute.xlu0 %2091
      %2094 = vset.pattern.permute.xlu0 6
      %2095 = vperm.xlu0 %2094, %v489
      %v2096 = vpop.permute.xlu0 %2095
      %2098 = vset.pattern.permute.xlu0 6
      %2099 = vperm.xlu0 %2098, %v490
      %v2100 = vpop.permute.xlu0 %2099
      %2102 = vset.pattern.permute.xlu0 6
      %2103 = vperm.xlu0 %2102, %v491
      %v2104 = vpop.permute.xlu0 %2103
      %v2106 = vmul.f32 %v2092, %v1398
      %v2107 = vmul.f32 %v2096, %v1404
      %v2108 = vmul.f32 %v2100, %v1410
      %v2109 = vmul.f32 %v2104, %v1416
      %2110 = vset.pattern.permute.xlu0 7
      %2111 = vperm.xlu0 %2110, %v488
      %v2112 = vpop.permute.xlu0 %2111
      %2114 = vset.pattern.permute.xlu0 7
      %2115 = vperm.xlu0 %2114, %v489
      %v2116 = vpop.permute.xlu0 %2115
      %2118 = vset.pattern.permute.xlu0 7
      %2119 = vperm.xlu0 %2118, %v490
      %v2120 = vpop.permute.xlu0 %2119
      %2122 = vset.pattern.permute.xlu0 7
      %2123 = vperm.xlu0 %2122, %v491
      %v2124 = vpop.permute.xlu0 %2123
      %v2126 = vmul.f32 %v2112, %v1400
      %v2127 = vmul.f32 %v2116, %v1406
      %v2128 = vmul.f32 %v2120, %v1412
      %v2129 = vmul.f32 %v2124, %v1418
      %2130 = vset.pattern.permute.xlu0 8
      %2131 = vperm.xlu0 %2130, %v488
      %v2132 = vpop.permute.xlu0 %2131
      %2134 = vset.pattern.permute.xlu0 8
      %2135 = vperm.xlu0 %2134, %v489
      %v2136 = vpop.permute.xlu0 %2135
      %2138 = vset.pattern.permute.xlu0 8
      %2139 = vperm.xlu0 %2138, %v490
      %v2140 = vpop.permute.xlu0 %2139
      %2142 = vset.pattern.permute.xlu0 8
      %2143 = vperm.xlu0 %2142, %v491
      %v2144 = vpop.permute.xlu0 %2143
      %v2146 = vmul.f32 %v2132, %v1487
      %v2147 = vmul.f32 %v2136, %v1493
      %v2148 = vmul.f32 %v2140, %v1499
      %v2149 = vmul.f32 %v2144, %v1505
      %2150 = vset.pattern.permute.xlu0 9
      %2151 = vperm.xlu0 %2150, %v488
      %v2152 = vpop.permute.xlu0 %2151
      %2154 = vset.pattern.permute.xlu0 9
      %2155 = vperm.xlu0 %2154, %v489
      %v2156 = vpop.permute.xlu0 %2155
      %2158 = vset.pattern.permute.xlu0 9
      %2159 = vperm.xlu0 %2158, %v490
      %v2160 = vpop.permute.xlu0 %2159
      %2162 = vset.pattern.permute.xlu0 9
      %2163 = vperm.xlu0 %2162, %v491
      %v2164 = vpop.permute.xlu0 %2163
      %v2166 = vmul.f32 %v2152, %v1489
      %v2167 = vmul.f32 %v2156, %v1495
      %v2168 = vmul.f32 %v2160, %v1501
      %v2169 = vmul.f32 %v2164, %v1507
      %2170 = vset.pattern.permute.xlu0 10
      %2171 = vperm.xlu0 %2170, %v488
      %v2172 = vpop.permute.xlu0 %2171
      %2174 = vset.pattern.permute.xlu0 10
      %2175 = vperm.xlu0 %2174, %v489
      %v2176 = vpop.permute.xlu0 %2175
      %2178 = vset.pattern.permute.xlu0 10
      %2179 = vperm.xlu0 %2178, %v490
      %v2180 = vpop.permute.xlu0 %2179
      %2182 = vset.pattern.permute.xlu0 10
      %2183 = vperm.xlu0 %2182, %v491
      %v2184 = vpop.permute.xlu0 %2183
      %v2186 = vmul.f32 %v2172, %v1576
      %v2187 = vmul.f32 %v2176, %v1582
      %v2188 = vmul.f32 %v2180, %v1588
      %v2189 = vmul.f32 %v2184, %v1594
      %2190 = vset.pattern.permute.xlu0 11
      %2191 = vperm.xlu0 %2190, %v488
      %v2192 = vpop.permute.xlu0 %2191
      %2194 = vset.pattern.permute.xlu0 11
      %2195 = vperm.xlu0 %2194, %v489
      %v2196 = vpop.permute.xlu0 %2195
      %2198 = vset.pattern.permute.xlu0 11
      %2199 = vperm.xlu0 %2198, %v490
      %v2200 = vpop.permute.xlu0 %2199
      %2202 = vset.pattern.permute.xlu0 11
      %2203 = vperm.xlu0 %2202, %v491
      %v2204 = vpop.permute.xlu0 %2203
      %v2206 = vmul.f32 %v2192, %v1578
      %v2207 = vmul.f32 %v2196, %v1584
      %v2208 = vmul.f32 %v2200, %v1590
      %v2209 = vmul.f32 %v2204, %v1596
      %2210 = vset.pattern.permute.xlu0 12
      %2211 = vperm.xlu0 %2210, %v488
      %v2212 = vpop.permute.xlu0 %2211
      %2214 = vset.pattern.permute.xlu0 12
      %2215 = vperm.xlu0 %2214, %v489
      %v2216 = vpop.permute.xlu0 %2215
      %2218 = vset.pattern.permute.xlu0 12
      %2219 = vperm.xlu0 %2218, %v490
      %v2220 = vpop.permute.xlu0 %2219
      %2222 = vset.pattern.permute.xlu0 12
      %2223 = vperm.xlu0 %2222, %v491
      %v2224 = vpop.permute.xlu0 %2223
      %v2226 = vmul.f32 %v2212, %v1665
      %v2227 = vmul.f32 %v2216, %v1671
      %v2228 = vmul.f32 %v2220, %v1677
      %v2229 = vmul.f32 %v2224, %v1683
      %2230 = vset.pattern.permute.xlu0 13
      %2231 = vperm.xlu0 %2230, %v488
      %v2232 = vpop.permute.xlu0 %2231
      %2234 = vset.pattern.permute.xlu0 13
      %2235 = vperm.xlu0 %2234, %v489
      %v2236 = vpop.permute.xlu0 %2235
      %2238 = vset.pattern.permute.xlu0 13
      %2239 = vperm.xlu0 %2238, %v490
      %v2240 = vpop.permute.xlu0 %2239
      %2242 = vset.pattern.permute.xlu0 13
      %2243 = vperm.xlu0 %2242, %v491
      %v2244 = vpop.permute.xlu0 %2243
      %v2246 = vmul.f32 %v2232, %v1667
      %v2247 = vmul.f32 %v2236, %v1673
      %v2248 = vmul.f32 %v2240, %v1679
      %v2249 = vmul.f32 %v2244, %v1685
      %2250 = vset.pattern.permute.xlu0 14
      %2251 = vperm.xlu0 %2250, %v488
      %v2252 = vpop.permute.xlu0 %2251
      %2254 = vset.pattern.permute.xlu0 14
      %2255 = vperm.xlu0 %2254, %v489
      %v2256 = vpop.permute.xlu0 %2255
      %2258 = vset.pattern.permute.xlu0 14
      %2259 = vperm.xlu0 %2258, %v490
      %v2260 = vpop.permute.xlu0 %2259
      %2262 = vset.pattern.permute.xlu0 14
      %2263 = vperm.xlu0 %2262, %v491
      %v2264 = vpop.permute.xlu0 %2263
      %v2266 = vmul.f32 %v2252, %v1754
      %v2267 = vmul.f32 %v2256, %v1760
      %v2268 = vmul.f32 %v2260, %v1766
      %v2269 = vmul.f32 %v2264, %v1772
      %2270 = vset.pattern.permute.xlu0 15
      %2271 = vperm.xlu0 %2270, %v488
      %v2272 = vpop.permute.xlu0 %2271
      %2274 = vset.pattern.permute.xlu0 15
      %2275 = vperm.xlu0 %2274, %v489
      %v2276 = vpop.permute.xlu0 %2275
      %2278 = vset.pattern.permute.xlu0 15
      %2279 = vperm.xlu0 %2278, %v490
      %v2280 = vpop.permute.xlu0 %2279
      %2282 = vset.pattern.permute.xlu0 15
      %2283 = vperm.xlu0 %2282, %v491
      %v2284 = vpop.permute.xlu0 %2283
      %v2286 = vmul.f32 %v2272, %v1756
      %v2287 = vmul.f32 %v2276, %v1762
      %v2288 = vmul.f32 %v2280, %v1768
      %v2289 = vmul.f32 %v2284, %v1774
      %v2290 = vadd.f32 %v1986, %v2006
      %v2291 = vadd.f32 %v1987, %v2007
      %v2292 = vadd.f32 %v1988, %v2008
      %v2293 = vadd.f32 %v1989, %v2009
      %v2294 = vadd.f32 %v2026, %v2046
      %v2295 = vadd.f32 %v2027, %v2047
      %v2296 = vadd.f32 %v2028, %v2048
      %v2297 = vadd.f32 %v2029, %v2049
      %v2298 = vadd.f32 %v2066, %v2086
      %v2299 = vadd.f32 %v2067, %v2087
      %v2300 = vadd.f32 %v2068, %v2088
      %v2301 = vadd.f32 %v2069, %v2089
      %v2302 = vadd.f32 %v2106, %v2126
      %v2303 = vadd.f32 %v2107, %v2127
      %v2304 = vadd.f32 %v2108, %v2128
      %v2305 = vadd.f32 %v2109, %v2129
      %v2306 = vadd.f32 %v2146, %v2166
      %v2307 = vadd.f32 %v2147, %v2167
      %v2308 = vadd.f32 %v2148, %v2168
      %v2309 = vadd.f32 %v2149, %v2169
      %v2310 = vadd.f32 %v2186, %v2206
      %v2311 = vadd.f32 %v2187, %v2207
      %v2312 = vadd.f32 %v2188, %v2208
      %v2313 = vadd.f32 %v2189, %v2209
      %v2314 = vadd.f32 %v2226, %v2246
      %v2315 = vadd.f32 %v2227, %v2247
      %v2316 = vadd.f32 %v2228, %v2248
      %v2317 = vadd.f32 %v2229, %v2249
      %v2318 = vadd.f32 %v2266, %v2286
      %v2319 = vadd.f32 %v2267, %v2287
      %v2320 = vadd.f32 %v2268, %v2288
      %v2321 = vadd.f32 %v2269, %v2289
      %v2322 = vadd.f32 %v2290, %v2294
      %v2323 = vadd.f32 %v2291, %v2295
      %v2324 = vadd.f32 %v2292, %v2296
      %v2325 = vadd.f32 %v2293, %v2297
      %v2326 = vadd.f32 %v2298, %v2302
      %v2327 = vadd.f32 %v2299, %v2303
      %v2328 = vadd.f32 %v2300, %v2304
      %v2329 = vadd.f32 %v2301, %v2305
      %v2330 = vadd.f32 %v2306, %v2310
      %v2331 = vadd.f32 %v2307, %v2311
      %v2332 = vadd.f32 %v2308, %v2312
      %v2333 = vadd.f32 %v2309, %v2313
      %v2334 = vadd.f32 %v2314, %v2318
      %v2335 = vadd.f32 %v2315, %v2319
      %v2336 = vadd.f32 %v2316, %v2320
      %v2337 = vadd.f32 %v2317, %v2321
      %v2338 = vadd.f32 %v2322, %v2326
      %v2339 = vadd.f32 %v2323, %v2327
      %v2340 = vadd.f32 %v2324, %v2328
      %v2341 = vadd.f32 %v2325, %v2329
      %v2342 = vadd.f32 %v2330, %v2334
      %v2343 = vadd.f32 %v2331, %v2335
      %v2344 = vadd.f32 %v2332, %v2336
      %v2345 = vadd.f32 %v2333, %v2337
      %v2346 = vadd.f32 %v2338, %v2342
      %v2347 = vadd.f32 %v2339, %v2343
      %v2348 = vadd.f32 %v2340, %v2344
      %v2349 = vadd.f32 %v2341, %v2345
      %v2350 = vadd.f32 %v2346, %v1863
      %v2351 = vadd.f32 %v2347, %v1869
      %v2352 = vadd.f32 %v2348, %v1875
      %v2353 = vadd.f32 %v2349, %v1881
      %v2354 = vmax.f32 %v2350, 0.0
      %v2355 = vmax.f32 %v2351, 0.0
      %v2356 = vmax.f32 %v2352, 0.0
      %v2357 = vmax.f32 %v2353, 0.0
      %v2358 = vmul.f32 %v2354, %v1865
      %v2359 = vmul.f32 %v2355, %v1871
      %v2360 = vmul.f32 %v2356, %v1877
      %v2361 = vmul.f32 %v2357, %v1883
      %2362 = vadd.xlane.f32.xlu0 %v2358
      %v2363 = vpop.xlane.xlu0 %2362
      %2364 = vadd.xlane.f32.xlu0 %v2359
      %v2365 = vpop.xlane.xlu0 %2364
      %2366 = vadd.xlane.f32.xlu0 %v2360
      %v2367 = vpop.xlane.xlu0 %2366
      %2368 = vadd.xlane.f32.xlu0 %v2361
      %v2369 = vpop.xlane.xlu0 %2368
      %v2370 = vadd.f32 %v2363, %v1952
      %v2371 = vadd.f32 %v2365, %v1957
      %v2372 = vadd.f32 %v2367, %v1962
      %v2373 = vadd.f32 %v2369, %v1967
      %vm2374 = vcmp.eq.s32.totalorder %v890, 0
      %v2375 = vsel %vm2374, %v921, 0.0
      %v2376 = vsel %vm2374, %v924, 0.0
      %v2377 = vsel %vm2374, %v927, 0.0
      %v2378 = vsel %vm2374, %v930, 0.0
      %vm2379 = vcmp.eq.s32.totalorder %v890, 1
      %2381 = vset.pattern.permute.xlu0 0
      %2382 = vperm.xlu0 %2381, %v2370
      %v2383 = vpop.permute.xlu0 %2382
      %2386 = vset.pattern.permute.xlu0 0
      %2387 = vperm.xlu0 %2386, %v2371
      %v2388 = vpop.permute.xlu0 %2387
      %2391 = vset.pattern.permute.xlu0 0
      %2392 = vperm.xlu0 %2391, %v2372
      %v2393 = vpop.permute.xlu0 %2392
      %2396 = vset.pattern.permute.xlu0 0
      %2397 = vperm.xlu0 %2396, %v2373
      %v2398 = vpop.permute.xlu0 %2397
      %v2400 = vsel %vm2379, %v2383, 0.0
      %v2401 = vsel %vm2379, %v2388, 0.0
      %v2402 = vsel %vm2379, %v2393, 0.0
      %v2403 = vsel %vm2379, %v2398, 0.0
      %v2404 = vadd.f32 %v2375, %v2400
      %v2405 = vadd.f32 %v2376, %v2401
      %v2406 = vadd.f32 %v2377, %v2402
      %v2407 = vadd.f32 %v2378, %v2403
      %vm2408 = vcmp.eq.s32.totalorder %v890, 2
      %v2409 = vsel %vm2408, %v947, 0.0
      %v2410 = vsel %vm2408, %v948, 0.0
      %v2411 = vsel %vm2408, %v949, 0.0
      %v2412 = vsel %vm2408, %v950, 0.0
      %v2413 = vadd.f32 %v2404, %v2409
      %v2414 = vadd.f32 %v2405, %v2410
      %v2415 = vadd.f32 %v2406, %v2411
      %v2416 = vadd.f32 %v2407, %v2412
      %2417 = vst [vmem:[%s486] sm:$0xff] %v2413
      %2418 = vst [vmem:[%s486 + $0x8] sm:$0xff] %v2414
      %2419 = vst [vmem:[%s486 + $0x10] sm:$0xff] %v2415
      %2420 = vst [vmem:[%s486 + $0x18] sm:$0xff] %v2416
      %s2421 = smul.u32 4, %s24
      %p2422 = scmp.lt.s32.totalorder %s2421, 7
      %s2423 = scalar_select %p2422, %s2421, 7
      %s2424 = smul.addr %s2423, 8
      %s2425 = scalar_lea.vmem %s13, %s2424
      // Predicated region
      $region73: #{hyperc_evaluate.1} parent=71 // pred_check
        %p2426 = pneg %p330
      $region74: #{hyperc_evaluate.1} parent=71 // pred_check_branch
        %2428 = sbr.rel (%p2426) target = $region76
      $region75: #{hyperc_evaluate.1} parent=71 // pred_region
        %s2429 = smul.u32 4, %s24
      $region76: #{hyperc_evaluate.1} parent=71 // pred_fallthru
        _
    $region72: #{hyperc_evaluate.1} parent=5 // pred_fallthru
      _
    %p2430 = scmp.le.s32.totalorder 2, %s19
    // Predicated region
    $region77: #{hyperc_evaluate.1} parent=5 // pred_check
      %p2431 = pneg %p2430
    $region78: #{hyperc_evaluate.1} parent=5 // pred_check_branch
      %2433 = sbr.rel (%p2431) target = $region80
    $region79: #{hyperc_evaluate.1} parent=5 // pred_region
      %s2434 = ssub.s32 %s19, 2
      // Predicated region
      $region81: #{hyperc_evaluate.1} parent=79 // pred_check
        %p2435 = pneg %p336
      $region82: #{hyperc_evaluate.1} parent=79 // pred_check_branch
        %2437 = sbr.rel (%p2435) target = $region84
      $region83: #{hyperc_evaluate.1} parent=79 // pred_region
        %s2438 = smul.u32 4, %s25
        %p2439 = scmp.lt.s32.totalorder %s2438, 7
        %s2440 = scalar_select %p2439, %s2438, 7
        %s2441 = smul.addr %s2440, 8
        %s2442 = scalar_lea.vmem %s13, %s2441
      $region84: #{hyperc_evaluate.1} parent=79 // pred_fallthru
        _
    $region80: #{hyperc_evaluate.1} parent=5 // pred_fallthru
      _
  $region6: #{hyperc_evaluate.1} parent=0 // loop_footer
    %s23 = sadd.s32 1, %s19
  $region7: #{hyperc_evaluate.1} parent=0 // loop_footer_branch
    %18 = sbr.rel target = $region3
  $region8: #{hyperc_evaluate.1} parent=0 // loop_exit
    _

</llo_original>
